<compile_context>
chip_gen: v7x
topology: tpu7x:2x2x1
jax: 0.10.0
libtpu: 0.0.40
codegen_flags: <defaults>
</compile_context>

<pallas_src>
from functools import partial

import jax
import jax.numpy as jnp
from jax.experimental import pallas as pl
from jax.experimental.pallas import tpu as pltpu


_BASE = 256   # row/col padding & tile granularity (multiple of the bf16 (16,128) tile)
_LANE = 128


def _round_up(x, m):
    return ((x + m - 1) // m) * m


def _choose_tiles(n, tm_req, tk_req):
    """Pad N to a fixed 256 multiple and pick tiles that divide it exactly."""
    npad = _round_up(max(n, _BASE), _BASE)

    def pick(req):
        t = max(_BASE, (min(req, npad) // _BASE) * _BASE)
        while npad % t != 0:
            t -= _BASE
        return t

    tm = pick(tm_req)
    # Give both v7x TensorCores work along the parallel row axis when possible.
    if npad // tm < 2 and npad // _BASE >= 2:
        tm = pick(npad // 2)
    tk = pick(tk_req)
    return npad, tm, tk


def _vmem_limit(working_set_bytes):
    # Generous headroom over the estimated working set; capped v7x-safe (<64 MiB phys).
    return int(min(max(2 * working_set_bytes + (4 << 20), 32 << 20), 48 << 20))


# --------------------------------------------------------------------------- kernels

def _layer1_kernel(adj_ref, sup_ref, b1_ref, w2_ref, s2_ref, acc_ref):
    """Grid step of: s2[i,:] = relu( sum_k adj[i,k] @ sup[k,:] + b1 ) @ W2  (bf16 out)."""
    k = pl.program_id(1)
    tk = adj_ref.shape[1]

    @pl.when(k == 0)
    def _():
        acc_ref[...] = jnp.zeros_like(acc_ref)

    koff = pl.multiple_of(k * tk, tk)
    acc_ref[...] += jnp.dot(adj_ref[...], sup_ref[pl.ds(koff, tk), :],
                            preferred_element_type=jnp.float32)

    @pl.when(k == pl.num_programs(1) - 1)
    def _():
        h = jnp.maximum(acc_ref[...] + b1_ref[...], 0.0)
        # F.dropout(training=False) -> identity.
        # TODO(synk): training-mode dropout needs pltpu.prng_seed/prng_random_bits here.
        s2_ref[...] = jnp.dot(h.astype(jnp.bfloat16), w2_ref[...],
                              preferred_element_type=jnp.float32).astype(s2_ref.dtype)


def _layer2_kernel(adj_ref, sup_ref, b2_ref, out_ref, *, nclass):
    """Grid step of: out[i,:] = log_softmax( sum_k adj[i,k] @ sup[k,:] + b2 ) (masked)."""
    k = pl.program_id(1)
    tk = adj_ref.shape[1]

    @pl.when(k == 0)
    def _():
        out_ref[...] = jnp.zeros_like(out_ref)

    koff = pl.multiple_of(k * tk, tk)
    # out block index is k-invariant -> VMEM-resident accumulator, no scratch needed.
    out_ref[...] += jnp.dot(adj_ref[...], sup_ref[pl.ds(koff, tk), :],
                            preferred_element_type=jnp.float32)

    @pl.when(k == pl.num_programs(1) - 1)
    def _():
        h = out_ref[...] + b2_ref[...]
        col = jax.lax.broadcasted_iota(jnp.int32, h.shape, 1)
        valid = col < nclass
        hm = jnp.where(valid, h, -jnp.inf)
        m = jnp.max(hm, axis=1, keepdims=True)
        z = hm - m
        lse = jnp.log(jnp.sum(jnp.exp(z), axis=1, keepdims=True))
        out_ref[...] = jnp.where(valid, z - lse, 0.0)


# ------------------------------------------------------------------------ layer calls

def _layer1(adj_p, s1_p, b1_p, w2_p, *, tm, tk):
    npad = adj_p.shape[0]
    hpad = s1_p.shape[1]
    cpad = w2_p.shape[1]
    grid = (npad // tm, npad // tk)
    ws = (2 * tm * tk * 2          # adj tiles (double buffered, bf16)
          + npad * hpad * 2        # resident support slab (bf16)
          + hpad * 4 + hpad * cpad * 2
          + 2 * tm * cpad * 2      # output tiles (bf16)
          + tm * hpad * 4)         # f32 accumulator scratch
    return pl.pallas_call(
        _layer1_kernel,
        out_shape=jax.ShapeDtypeStruct((npad, cpad), jnp.bfloat16),
        grid_spec=pltpu.PrefetchScalarGridSpec(
            num_scalar_prefetch=0,
            grid=grid,
            in_specs=[
                pl.BlockSpec((tm, tk), lambda i, k: (i, k)),      # adj tile (streamed)
                pl.BlockSpec((npad, hpad), lambda i, k: (0, 0)),  # support (VMEM resident)
                pl.BlockSpec((1, hpad), lambda i, k: (0, 0)),     # b1 (resident)
                pl.BlockSpec((hpad, cpad), lambda i, k: (0, 0)),  # W2 (resident)
            ],
            out_specs=pl.BlockSpec((tm, cpad), lambda i, k: (i, 0)),
            scratch_shapes=[pltpu.VMEM((tm, hpad), jnp.float32)],
        ),
        compiler_params=pltpu.CompilerParams(
            dimension_semantics=("parallel", "arbitrary"),
            vmem_limit_bytes=_vmem_limit(ws)),
    )(adj_p, s1_p, b1_p, w2_p)


def _layer2(adj_p, s2_p, b2_p, *, nclass, tm, tk):
    npad = adj_p.shape[0]
    cpad = s2_p.shape[1]
    grid = (npad // tm, npad // tk)
    ws = (2 * tm * tk * 2          # adj tiles (double buffered, bf16)
          + npad * cpad * 2        # resident support slab (bf16)
          + cpad * 4
          + 2 * tm * cpad * 4)     # f32 output tiles (double buffered)
    return pl.pallas_call(
        partial(_layer2_kernel, nclass=nclass),
        out_shape=jax.ShapeDtypeStruct((npad, cpad), jnp.float32),
        grid_spec=pltpu.PrefetchScalarGridSpec(
            num_scalar_prefetch=0,
            grid=grid,
            in_specs=[
                pl.BlockSpec((tm, tk), lambda i, k: (i, k)),      # adj tile (streamed)
                pl.BlockSpec((npad, cpad), lambda i, k: (0, 0)),  # support (VMEM resident)
                pl.BlockSpec((1, cpad), lambda i, k: (0, 0)),     # b2 (resident)
            ],
            out_specs=pl.BlockSpec((tm, cpad), lambda i, k: (i, 0)),
        ),
        compiler_params=pltpu.CompilerParams(
            dimension_semantics=("parallel", "arbitrary"),
            vmem_limit_bytes=_vmem_limit(ws)),
    )(adj_p, s2_p, b2_p)


# ---------------------------------------------------------------------------- wrapper

def gcn_prepare_adj(adj, *, tm=512, tk=1024):
    """Pad + f32->bf16 cast the (dense, normalized) adjacency ONCE per graph."""
    n = adj.shape[0]
    npad, tm, tk = _choose_tiles(n, tm, tk)
    adj_p = jnp.pad(adj.astype(jnp.bfloat16), ((0, npad - n), (0, npad - n)))
    return adj_p, (n, tm, tk)


def gcn_forward(x, adj_p, w1, b1, w2, b2, *, plan):
    """Eval-mode GCN forward:
         out = log_softmax(adj @ (relu(adj @ (x @ W1) + b1) @ W2) + b2, axis=1)."""
    n, tm, tk = plan
    npad = adj_p.shape[0]
    nhid = w1.shape[1]
    nclass = w2.shape[1]
    hpad = _round_up(nhid, _LANE)
    cpad = _round_up(nclass, _LANE)

    # Tiny feature matmul x @ W1 stays in XLA (far below MXU tile granularity).
    s1 = jnp.dot(x, w1)
    s1_p = jnp.pad(s1.astype(jnp.bfloat16), ((0, npad - n), (0, hpad - nhid)))
    b1_p = jnp.pad(b1.reshape(1, -1).astype(jnp.float32), ((0, 0), (0, hpad - nhid)))
    w2_p = jnp.pad(w2.astype(jnp.bfloat16), ((0, hpad - nhid), (0, cpad - nclass)))
    b2_p = jnp.pad(b2.reshape(1, -1).astype(jnp.float32), ((0, 0), (0, cpad - nclass)))

    # Layer 1 (fused with h1 @ W2): s2 = relu(adj @ s1 + b1) @ W2   (bf16, padded)
    s2_p = _layer1(adj_p, s1_p, b1_p, w2_p, tm=tm, tk=tk)

    # Layer 2: out = log_softmax(adj @ s2 + b2)
    out = _layer2(adj_p, s2_p, b2_p, nclass=nclass, tm=tm, tk=tk)
    return out[:n, :nclass]


def init_gc_params(key, in_features, out_features):
    # Uniform(-stdv, stdv) init like GraphConvolution.reset_parameters.
    stdv = 1.0 / jnp.sqrt(jnp.float32(out_features))
    kw, kb = jax.random.split(key)
    w = jax.random.uniform(kw, (in_features, out_features), jnp.float32, -stdv, stdv)
    b = jax.random.uniform(kb, (1, out_features), jnp.float32, -stdv, stdv)
    return w, b


if __name__ == "__main__":
    # N nodes, nfeat -> nhid -> nclass.  N=600 -> Npad=768 so a 3x3 tiled grid
    # (row-parallel axis + multi-step reduction + padded rows/lanes) is exercised.
    N, nfeat, nhid, nclass = 600, 16, 32, 7
    key = jax.random.PRNGKey(0)
    kx, kadj, k1, k2 = jax.random.split(key, 4)

    x = jax.random.normal(kx, (N, nfeat), jnp.float32)

    # Symmetric-normalized adjacency with self loops.
    a = (jax.random.uniform(kadj, (N, N)) > 0.5).astype(jnp.float32)
    a = jnp.maximum(a, a.T) + jnp.eye(N, dtype=jnp.float32)
    deg = jnp.sum(a, axis=1, keepdims=True)
    adj = a / jnp.sqrt(deg) / jnp.sqrt(deg.T)

    w1, b1 = init_gc_params(k1, nfeat, nhid)
    w2, b2 = init_gc_params(k2, nhid, nclass)

    # Small requested tiles so the accumulating multi-tile path is exercised here;
    # production defaults (tm=512, tk=1024) kick in automatically for large graphs.
    adj_p, plan = gcn_prepare_adj(adj, tm=256, tk=256)     # hoisted pad/cast, once per graph
    fwd = jax.jit(gcn_forward, static_argnames=("plan",))
    out = fwd(x, adj_p, w1, b1, w2, b2, plan=plan)
    jax.block_until_ready(out)

    # Reference mirroring the kernel's bf16-input / f32-accumulate arithmetic.
    adj_bf = adj.astype(jnp.bfloat16)
    s1 = jnp.dot(x, w1).astype(jnp.bfloat16)
    h1 = jnp.maximum(jnp.dot(adj_bf, s1, preferred_element_type=jnp.float32) + b1, 0.0)
    s2 = jnp.dot(h1.astype(jnp.bfloat16), w2.astype(jnp.bfloat16),
                 preferred_element_type=jnp.float32).astype(jnp.bfloat16)
    h2 = jnp.dot(adj_bf, s2, preferred_element_type=jnp.float32) + b2
    ref = h2 - jax.scipy.special.logsumexp(h2, axis=1, keepdims=True)
    assert jnp.allclose(out, ref, atol=2e-2, rtol=2e-2), "mismatch vs bf16 reference"

    # Loose sanity check against the pure-f32 math of the PyTorch module.
    h1f = jnp.maximum(adj @ (x @ w1) + b1, 0.0)
    h2f = adj @ (h1f @ w2) + b2
    ref32 = h2f - jax.scipy.special.logsumexp(h2f, axis=1, keepdims=True)
    assert jnp.allclose(out, ref32, atol=7e-2, rtol=7e-2), "mismatch vs f32 reference"

    print("KERNEL_OK")
</pallas_src>

<mosaic_0001>
module attributes {stable_mosaic.version = 11 : i64} {
  func.func @_layer1_kernel(%arg0: i32, %arg1: i32, %arg2: memref<256x256xbf16, #tpu.memory_space<vmem>>, %arg3: memref<768x128xbf16, #tpu.memory_space<vmem>>, %arg4: memref<1x128xf32, #tpu.memory_space<vmem>>, %arg5: memref<128x128xbf16, #tpu.memory_space<vmem>>, %arg6: memref<256x128xbf16, #tpu.memory_space<vmem>>, %arg7: memref<256x128xf32, #tpu.memory_space<vmem>>) attributes {dimension_semantics = [#tpu.dimension_semantics<parallel>, #tpu.dimension_semantics<arbitrary>], iteration_bounds = array<i64: 3, 3>, scalar_prefetch = 0 : i64, scratch_operands = 1 : i64, tpu.core_type = #tpu.core_type<tc>, window_params = [{transform_indices = @transform_0, window_bounds = array<i64: 256, 256>}, {pipeline_mode = #tpu.pipeline_mode<synchronous>, transform_indices = @transform_1, window_bounds = array<i64: 768, 128>}, {pipeline_mode = #tpu.pipeline_mode<synchronous>, transform_indices = @transform_2, window_bounds = array<i64: 1, 128>}, {pipeline_mode = #tpu.pipeline_mode<synchronous>, transform_indices = @transform_3, window_bounds = array<i64: 128, 128>}, {transform_indices = @transform_4, window_bounds = array<i64: 256, 128>}]} {
    %c0_i32 = arith.constant 0 : i32
    %0 = arith.cmpi eq, %arg1, %c0_i32 : i32
    %1 = arith.extui %0 : i1 to i32
    %c0_i32_0 = arith.constant 0 : i32
    %2 = arith.cmpi ne, %1, %c0_i32_0 : i32
    scf.if %2 {
      %cst_8 = arith.constant 0.000000e+00 : f32
      %15 = vector.broadcast %cst_8 : f32 to vector<256x128xf32>
      %c0_9 = arith.constant 0 : index
      %c0_10 = arith.constant 0 : index
      %16 = vector.load %arg7[%c0_9, %c0_10] : memref<256x128xf32, #tpu.memory_space<vmem>>, vector<256x128xf32>
      tpu.vector_store %arg7[%c0_9, %c0_10], %15 {strides = array<i32>} : memref<256x128xf32, #tpu.memory_space<vmem>>, vector<256x128xf32>,
    } else {
    }
    %c256_i32 = arith.constant 256 : i32
    %3 = arith.muli %arg1, %c256_i32 : i32
    %4 = tpu.assume_multiple %3, 256 : i32
    %c0 = arith.constant 0 : index
    %c0_1 = arith.constant 0 : index
    %5 = vector.load %arg7[%c0, %c0_1] : memref<256x128xf32, #tpu.memory_space<vmem>>, vector<256x128xf32>
    %c0_2 = arith.constant 0 : index
    %c0_3 = arith.constant 0 : index
    %6 = vector.load %arg2[%c0_2, %c0_3] : memref<256x256xbf16, #tpu.memory_space<vmem>>, vector<256x256xbf16>
    %7 = arith.index_cast %4 : i32 to index
    %c0_4 = arith.constant 0 : index
    %8 = vector.load %arg3[%7, %c0_4] : memref<768x128xbf16, #tpu.memory_space<vmem>>, vector<256x128xbf16>
    %cst = arith.constant dense<0.000000e+00> : vector<256x128xf32>
    %9 = tpu.matmul %6, %8, %cst {dimension_numbers = #tpu.dot_dimension_numbers<[1], [0], [0], [1], [0, 0, 1, 1], [], []>} : vector<256x256xbf16>, vector<256x128xbf16>, vector<256x128xf32> -> vector<256x128xf32>
    %10 = arith.addf %5, %9 : vector<256x128xf32>
    %c0_5 = arith.constant 0 : index
    %c0_6 = arith.constant 0 : index
    %11 = vector.load %arg7[%c0_5, %c0_6] : memref<256x128xf32, #tpu.memory_space<vmem>>, vector<256x128xf32>
    tpu.vector_store %arg7[%c0_5, %c0_6], %10 {strides = array<i32>} : memref<256x128xf32, #tpu.memory_space<vmem>>, vector<256x128xf32>,
    %c2_i32 = arith.constant 2 : i32
    %12 = arith.cmpi eq, %arg1, %c2_i32 : i32
    %13 = arith.extui %12 : i1 to i32
    %c0_i32_7 = arith.constant 0 : i32
    %14 = arith.cmpi ne, %13, %c0_i32_7 : i32
    scf.if %14 {
      %c0_8 = arith.constant 0 : index
      %c0_9 = arith.constant 0 : index
      %15 = vector.load %arg7[%c0_8, %c0_9] : memref<256x128xf32, #tpu.memory_space<vmem>>, vector<256x128xf32>
      %c0_10 = arith.constant 0 : index
      %c0_11 = arith.constant 0 : index
      %16 = vector.load %arg4[%c0_10, %c0_11] : memref<1x128xf32, #tpu.memory_space<vmem>>, vector<1x128xf32>
      %17 = vector.broadcast %16 : vector<1x128xf32> to vector<256x128xf32>
      %18 = arith.addf %15, %17 : vector<256x128xf32>
      %cst_12 = arith.constant 0.000000e+00 : f32
      %19 = vector.broadcast %cst_12 : f32 to vector<256x128xf32>
      %20 = arith.maximumf %18, %19 : vector<256x128xf32>
      %21 = arith.truncf %20 : vector<256x128xf32> to vector<256x128xbf16>
      %c0_13 = arith.constant 0 : index
      %c0_14 = arith.constant 0 : index
      %22 = vector.load %arg5[%c0_13, %c0_14] : memref<128x128xbf16, #tpu.memory_space<vmem>>, vector<128x128xbf16>
      %cst_15 = arith.constant dense<0.000000e+00> : vector<256x128xf32>
      %23 = tpu.matmul %21, %22, %cst_15 {dimension_numbers = #tpu.dot_dimension_numbers<[1], [0], [0], [1], [0, 0, 1, 1], [], []>} : vector<256x128xbf16>, vector<128x128xbf16>, vector<256x128xf32> -> vector<256x128xf32>
      %24 = arith.truncf %23 : vector<256x128xf32> to vector<256x128xbf16>
      %c0_16 = arith.constant 0 : index
      %c0_17 = arith.constant 0 : index
      %25 = vector.load %arg6[%c0_16, %c0_17] : memref<256x128xbf16, #tpu.memory_space<vmem>>, vector<256x128xbf16>
      tpu.vector_store %arg6[%c0_16, %c0_17], %24 {strides = array<i32>} : memref<256x128xbf16, #tpu.memory_space<vmem>>, vector<256x128xbf16>,
    } else {
    }
    return
  }
  func.func @transform_0(%arg0: i32, %arg1: i32) -> (i32, i32) {
    %c0_i32 = arith.constant 0 : i32
    return %arg0, %arg1 : i32, i32
  }
  func.func @transform_1(%arg0: i32, %arg1: i32) -> (i32, i32) {
    %c0_i32 = arith.constant 0 : i32
    %c0_i32_0 = arith.constant 0 : i32
    %c0_i32_1 = arith.constant 0 : i32
    return %c0_i32, %c0_i32_0 : i32, i32
  }
  func.func @transform_2(%arg0: i32, %arg1: i32) -> (i32, i32) {
    %c0_i32 = arith.constant 0 : i32
    %c0_i32_0 = arith.constant 0 : i32
    %c0_i32_1 = arith.constant 0 : i32
    return %c0_i32, %c0_i32_0 : i32, i32
  }
  func.func @transform_3(%arg0: i32, %arg1: i32) -> (i32, i32) {
    %c0_i32 = arith.constant 0 : i32
    %c0_i32_0 = arith.constant 0 : i32
    %c0_i32_1 = arith.constant 0 : i32
    return %c0_i32, %c0_i32_0 : i32, i32
  }
  func.func @transform_4(%arg0: i32, %arg1: i32) -> (i32, i32) {
    %c0_i32 = arith.constant 0 : i32
    %c0_i32_0 = arith.constant 0 : i32
    return %arg0, %c0_i32 : i32, i32
  }
}

module attributes {stable_mosaic.version = 11 : i64} {
  func.func @_layer2_kernel(%arg0: i32, %arg1: i32, %arg2: memref<256x256xbf16, #tpu.memory_space<vmem>>, %arg3: memref<768x128xbf16, #tpu.memory_space<vmem>>, %arg4: memref<1x128xf32, #tpu.memory_space<vmem>>, %arg5: memref<256x128xf32, #tpu.memory_space<vmem>>) attributes {dimension_semantics = [#tpu.dimension_semantics<parallel>, #tpu.dimension_semantics<arbitrary>], iteration_bounds = array<i64: 3, 3>, scalar_prefetch = 0 : i64, scratch_operands = 0 : i64, tpu.core_type = #tpu.core_type<tc>, window_params = [{transform_indices = @transform_0, window_bounds = array<i64: 256, 256>}, {pipeline_mode = #tpu.pipeline_mode<synchronous>, transform_indices = @transform_1, window_bounds = array<i64: 768, 128>}, {pipeline_mode = #tpu.pipeline_mode<synchronous>, transform_indices = @transform_2, window_bounds = array<i64: 1, 128>}, {transform_indices = @transform_3, window_bounds = array<i64: 256, 128>}]} {
    %c0_i32 = arith.constant 0 : i32
    %0 = arith.cmpi eq, %arg1, %c0_i32 : i32
    %1 = arith.extui %0 : i1 to i32
    %c0_i32_0 = arith.constant 0 : i32
    %2 = arith.cmpi ne, %1, %c0_i32_0 : i32
    scf.if %2 {
      %cst_8 = arith.constant 0.000000e+00 : f32
      %15 = vector.broadcast %cst_8 : f32 to vector<256x128xf32>
      %c0_9 = arith.constant 0 : index
      %c0_10 = arith.constant 0 : index
      %16 = vector.load %arg5[%c0_9, %c0_10] : memref<256x128xf32, #tpu.memory_space<vmem>>, vector<256x128xf32>
      tpu.vector_store %arg5[%c0_9, %c0_10], %15 {strides = array<i32>} : memref<256x128xf32, #tpu.memory_space<vmem>>, vector<256x128xf32>,
    } else {
    }
    %c256_i32 = arith.constant 256 : i32
    %3 = arith.muli %arg1, %c256_i32 : i32
    %4 = tpu.assume_multiple %3, 256 : i32
    %c0 = arith.constant 0 : index
    %c0_1 = arith.constant 0 : index
    %5 = vector.load %arg5[%c0, %c0_1] : memref<256x128xf32, #tpu.memory_space<vmem>>, vector<256x128xf32>
    %c0_2 = arith.constant 0 : index
    %c0_3 = arith.constant 0 : index
    %6 = vector.load %arg2[%c0_2, %c0_3] : memref<256x256xbf16, #tpu.memory_space<vmem>>, vector<256x256xbf16>
    %7 = arith.index_cast %4 : i32 to index
    %c0_4 = arith.constant 0 : index
    %8 = vector.load %arg3[%7, %c0_4] : memref<768x128xbf16, #tpu.memory_space<vmem>>, vector<256x128xbf16>
    %cst = arith.constant dense<0.000000e+00> : vector<256x128xf32>
    %9 = tpu.matmul %6, %8, %cst {dimension_numbers = #tpu.dot_dimension_numbers<[1], [0], [0], [1], [0, 0, 1, 1], [], []>} : vector<256x256xbf16>, vector<256x128xbf16>, vector<256x128xf32> -> vector<256x128xf32>
    %10 = arith.addf %5, %9 : vector<256x128xf32>
    %c0_5 = arith.constant 0 : index
    %c0_6 = arith.constant 0 : index
    %11 = vector.load %arg5[%c0_5, %c0_6] : memref<256x128xf32, #tpu.memory_space<vmem>>, vector<256x128xf32>
    tpu.vector_store %arg5[%c0_5, %c0_6], %10 {strides = array<i32>} : memref<256x128xf32, #tpu.memory_space<vmem>>, vector<256x128xf32>,
    %c2_i32 = arith.constant 2 : i32
    %12 = arith.cmpi eq, %arg1, %c2_i32 : i32
    %13 = arith.extui %12 : i1 to i32
    %c0_i32_7 = arith.constant 0 : i32
    %14 = arith.cmpi ne, %13, %c0_i32_7 : i32
    scf.if %14 {
      %c0_8 = arith.constant 0 : index
      %c0_9 = arith.constant 0 : index
      %15 = vector.load %arg5[%c0_8, %c0_9] : memref<256x128xf32, #tpu.memory_space<vmem>>, vector<256x128xf32>
      %c0_10 = arith.constant 0 : index
      %c0_11 = arith.constant 0 : index
      %16 = vector.load %arg4[%c0_10, %c0_11] : memref<1x128xf32, #tpu.memory_space<vmem>>, vector<1x128xf32>
      %17 = vector.broadcast %16 : vector<1x128xf32> to vector<256x128xf32>
      %18 = arith.addf %15, %17 : vector<256x128xf32>
      %19 = tpu.iota {dimensions = array<i32: 1>} : vector<256x128xi32>
      %c7_i32 = arith.constant 7 : i32
      %20 = vector.broadcast %c7_i32 : i32 to vector<256x128xi32>
      %21 = arith.cmpi slt, %19, %20 : vector<256x128xi32>
      %cst_12 = arith.constant 0xFF800000 : f32
      %22 = vector.broadcast %cst_12 : f32 to vector<256x128xf32>
      %23 = arith.select %21, %18, %22 : vector<256x128xi1>, vector<256x128xf32>
      %cst_13 = arith.constant dense<0xFF800000> : vector<256xf32>
      %24 = vector.multi_reduction <maximumf>, %23, %cst_13 [1] : vector<256x128xf32> to vector<256xf32>
      %25 = vector.shape_cast %24 : vector<256xf32> to vector<256x1xf32>
      %26 = vector.broadcast %25 : vector<256x1xf32> to vector<256x128xf32>
      %27 = arith.subf %23, %26 : vector<256x128xf32>
      %28 = math.exp %27 : vector<256x128xf32>
      %cst_14 = arith.constant dense<0.000000e+00> : vector<256xf32>
      %29 = vector.multi_reduction <add>, %28, %cst_14 [1] : vector<256x128xf32> to vector<256xf32>
      %30 = vector.shape_cast %29 : vector<256xf32> to vector<256x1xf32>
      %31 = math.log %30 : vector<256x1xf32>
      %32 = vector.broadcast %31 : vector<256x1xf32> to vector<256x128xf32>
      %33 = arith.subf %27, %32 : vector<256x128xf32>
      %cst_15 = arith.constant 0.000000e+00 : f32
      %34 = vector.broadcast %cst_15 : f32 to vector<256x128xf32>
      %35 = arith.select %21, %33, %34 : vector<256x128xi1>, vector<256x128xf32>
      %c0_16 = arith.constant 0 : index
      %c0_17 = arith.constant 0 : index
      %36 = vector.load %arg5[%c0_16, %c0_17] : memref<256x128xf32, #tpu.memory_space<vmem>>, vector<256x128xf32>
      tpu.vector_store %arg5[%c0_16, %c0_17], %35 {strides = array<i32>} : memref<256x128xf32, #tpu.memory_space<vmem>>, vector<256x128xf32>,
    } else {
    }
    return
  }
  func.func @transform_0(%arg0: i32, %arg1: i32) -> (i32, i32) {
    %c0_i32 = arith.constant 0 : i32
    return %arg0, %arg1 : i32, i32
  }
  func.func @transform_1(%arg0: i32, %arg1: i32) -> (i32, i32) {
    %c0_i32 = arith.constant 0 : i32
    %c0_i32_0 = arith.constant 0 : i32
    %c0_i32_1 = arith.constant 0 : i32
    return %c0_i32, %c0_i32_0 : i32, i32
  }
  func.func @transform_2(%arg0: i32, %arg1: i32) -> (i32, i32) {
    %c0_i32 = arith.constant 0 : i32
    %c0_i32_0 = arith.constant 0 : i32
    %c0_i32_1 = arith.constant 0 : i32
    return %c0_i32, %c0_i32_0 : i32, i32
  }
  func.func @transform_3(%arg0: i32, %arg1: i32) -> (i32, i32) {
    %c0_i32 = arith.constant 0 : i32
    %c0_i32_0 = arith.constant 0 : i32
    return %arg0, %c0_i32 : i32, i32
  }
}

</mosaic_0001>

<llo_original>
// kernel: gcn_forward.3
$region0: #{gcn_forward.3}
  #allocation0 [shape = 'u32[]', space=smem, size = 0x4, offset = 0x4, fixed_abs, tag = 'smem constant byte address 0x4 - core index']
  #allocation1 [shape = 'u32[144,128]{1,0:T(1,128)}', space=vmem, size = 0x12000, scoped, tag = 'internal scratch']
  %s0 = inlined_call_operand.vmem [shape: bf16[768,768], index: 0, kind: input, shape index: {}]
  %s1 = inlined_call_operand.vmem [shape: bf16[768,128], index: 1, kind: input, shape index: {}]
  %s2 = inlined_call_operand.vmem [shape: f32[1,128], index: 2, kind: input, shape index: {}]
  %s3 = inlined_call_operand.vmem [shape: f32[768,128], index: 3, kind: output, shape index: {}]
  %s4 = sld [smem:[#allocation0]]
  $region91: #{gcn_forward.3} parent=0
    _
  %s6 = ssub.s32 1, %s4
  %s7 = scalar_select 0, %s6, %s4
  $region1: #{gcn_forward.3} parent=0
    #allocation2 [shape = 'u8[262144]{0}', space=vmem, size = 0x40000, scoped, tag = 'input window, operand 0']
    loop: start=0, step=1, limit=11
    $region2: #{gcn_forward.3} parent=1 // loop_pre_header
      _
    $region3: #{gcn_forward.3} parent=1 // loop_header
      %s9 = sphi 0, %s13
      %p10 = scmp.ge.s32.totalorder %s9, 11
      %s16 = sphi 0, %s28
      %s17 = sphi 0, %s24
      %s18 = sphi 0, %s16
      %s19 = sphi 0, %s17
      %s20 = sphi 0, %s18
      %s21 = sphi 0, %s19
      %s33 = sphi 0, %s35
      %s36 = sphi 0, %s33
      %s37 = sphi 0, %s36
      %s53 = sphi 0, %s37
      %s57 = sphi 0, %s57
      %s59 = sphi 0, %s57
      %s60 = sphi 0, %s59
      %s74 = sphi 0, %s60
      %s78 = sphi 0, %s78
      %s80 = sphi 0, %s78
      %s81 = sphi 0, %s80
      %s95 = sphi 0, %s81
      %s101 = sphi 0, %s103
      %s104 = sphi 0, %s101
      %s105 = sphi 0, %s104
      %s121 = sphi 0, %s105
    $region4: #{gcn_forward.3} parent=1 // loop_header_branch
      %12 = sbr.rel (%p10) target = $region8
    $region5: #{gcn_forward.3} parent=1 // loop_body
      %s14 = ssub.s32 %s9, 1
      %s15 = ssub.s32 %s9, 2
      %s22 = sadd.s32 1, %s17
      %p23 = scmp.ge.s32.totalorder %s22, 3
      %s24 = scalar_select %p23, 0, %s22
      %s25 = sadd.s32 1, %s16
      %s26 = scalar_select %p23, %s25, %s16
      %p27 = scmp.ge.s32.totalorder %s26, 3
      %s28 = scalar_select %p27, 0, %s26
      %s29 = ssub.s32 %s16, %s28
      %s30 = ssub.s32 %s17, %s24
      %s31 = sor.u32 %s29, %s30
      %p32 = scmp.eq.s32.totalorder %s31, 0
      %s34 = sadd.s32 %s33, 1
      %s35 = scalar_select %p32, %s33, %s34
      %p38 = pneg %p32
      %p39 = scmp.eq.s32.totalorder %s9, 8
      %p40 = por %p38, %p39
      %p41 = scmp.ne.s32.totalorder %s33, %s36
      %p42 = scmp.eq.s32.totalorder %s9, 0
      %p43 = por %p41, %p42
      %p44 = scmp.ne.s32.totalorder %s33, %s36
      %p45 = scmp.eq.s32.totalorder %s14, 8
      %p46 = por %p44, %p45
      %p47 = scmp.ne.s32.totalorder %s36, %s37
      %p48 = scmp.eq.s32.totalorder %s14, 0
      %p49 = por %p47, %p48
      %p50 = scmp.ne.s32.totalorder %s36, %s37
      %p51 = scmp.eq.s32.totalorder %s15, 8
      %p52 = por %p50, %p51
      %p54 = scmp.ne.s32.totalorder %s37, %s53
      %p55 = scmp.eq.s32.totalorder %s15, 0
      %p56 = por %p54, %p55
      %s58 = sadd.s32 %s57, 1
      %p61 = scmp.eq.s32.totalorder %s9, 8
      %p62 = scmp.ne.s32.totalorder %s57, %s59
      %p63 = scmp.eq.s32.totalorder %s9, 0
      %p64 = por %p62, %p63
      %p65 = scmp.ne.s32.totalorder %s57, %s59
      %p66 = scmp.eq.s32.totalorder %s14, 8
      %p67 = por %p65, %p66
      %p68 = scmp.ne.s32.totalorder %s59, %s60
      %p69 = scmp.eq.s32.totalorder %s14, 0
      %p70 = por %p68, %p69
      %p71 = scmp.ne.s32.totalorder %s59, %s60
      %p72 = scmp.eq.s32.totalorder %s15, 8
      %p73 = por %p71, %p72
      %p75 = scmp.ne.s32.totalorder %s60, %s74
      %p76 = scmp.eq.s32.totalorder %s15, 0
      %p77 = por %p75, %p76
      %s79 = sadd.s32 %s78, 1
      %p82 = scmp.eq.s32.totalorder %s9, 8
      %p83 = scmp.ne.s32.totalorder %s78, %s80
      %p84 = scmp.eq.s32.totalorder %s9, 0
      %p85 = por %p83, %p84
      %p86 = scmp.ne.s32.totalorder %s78, %s80
      %p87 = scmp.eq.s32.totalorder %s14, 8
      %p88 = por %p86, %p87
      %p89 = scmp.ne.s32.totalorder %s80, %s81
      %p90 = scmp.eq.s32.totalorder %s14, 0
      %p91 = por %p89, %p90
      %p92 = scmp.ne.s32.totalorder %s80, %s81
      %p93 = scmp.eq.s32.totalorder %s15, 8
      %p94 = por %p92, %p93
      %p96 = scmp.ne.s32.totalorder %s81, %s95
      %p97 = scmp.eq.s32.totalorder %s15, 0
      %p98 = por %p96, %p97
      %s99 = ssub.s32 %s16, %s28
      %p100 = scmp.eq.s32.totalorder %s99, 0
      %s102 = sadd.s32 %s101, 1
      %s103 = scalar_select %p100, %s101, %s102
      %p106 = pneg %p100
      %p107 = scmp.eq.s32.totalorder %s9, 8
      %p108 = por %p106, %p107
      %p109 = scmp.ne.s32.totalorder %s101, %s104
      %p110 = scmp.eq.s32.totalorder %s9, 0
      %p111 = por %p109, %p110
      %p112 = scmp.ne.s32.totalorder %s101, %s104
      %p113 = scmp.eq.s32.totalorder %s14, 8
      %p114 = por %p112, %p113
      %p115 = scmp.ne.s32.totalorder %s104, %s105
      %p116 = scmp.eq.s32.totalorder %s14, 0
      %p117 = por %p115, %p116
      %p118 = scmp.ne.s32.totalorder %s104, %s105
      %p119 = scmp.eq.s32.totalorder %s15, 8
      %p120 = por %p118, %p119
      %p122 = scmp.ne.s32.totalorder %s105, %s121
      %p123 = scmp.eq.s32.totalorder %s15, 0
      %p124 = por %p122, %p123
      %p125 = scmp.le.s32.totalorder 1, %s9
      %p126 = scmp.lt.s32.totalorder %s9, 10
      %p127 = pnand %p125, %p126
      %p128 = pneg %p127
      // Predicated region
      $region9: #{gcn_forward.3} parent=5 // pred_check
        _
      $region10: #{gcn_forward.3} parent=5 // pred_check_branch
        %130 = sbr.rel (%p127) target = $region12
      $region11: #{gcn_forward.3} parent=5 // pred_region
        %s131 = ssub.s32 %s9, 1
        // Predicated region
        $region13: #{gcn_forward.3} parent=11 // pred_check
          %p132 = pneg %p70
        $region14: #{gcn_forward.3} parent=11 // pred_check_branch
          %134 = sbr.rel (%p132) target = $region16
        $region15: #{gcn_forward.3} parent=11 // pred_region
          _
        $region16: #{gcn_forward.3} parent=11 // pred_fallthru
          _
        // Predicated region
        $region17: #{gcn_forward.3} parent=11 // pred_check
          %p135 = pneg %p91
        $region18: #{gcn_forward.3} parent=11 // pred_check_branch
          %137 = sbr.rel (%p135) target = $region20
        $region19: #{gcn_forward.3} parent=11 // pred_region
          _
        $region20: #{gcn_forward.3} parent=11 // pred_fallthru
          _
      $region12: #{gcn_forward.3} parent=5 // pred_fallthru
        _
      %p138 = scmp.lt.s32.totalorder %s9, 9
      // Predicated region
      $region21: #{gcn_forward.3} parent=5 // pred_check
        %p139 = pneg %p138
      $region22: #{gcn_forward.3} parent=5 // pred_check_branch
        %141 = sbr.rel (%p139) target = $region24
      $region23: #{gcn_forward.3} parent=5 // pred_region
        // Predicated region
        $region25: #{gcn_forward.3} parent=23 // pred_check
          %p142 = pneg %p43
        $region26: #{gcn_forward.3} parent=23 // pred_check_branch
          %144 = sbr.rel (%p142) target = $region28
        $region27: #{gcn_forward.3} parent=23 // pred_region
          %s145 = sand.u32 %s33, 1
          %s146 = sand.u32 %s33, 1
          %s147 = smul.addr %s146, 256
          %s148 = scalar_lea.vmem [#allocation2], %s147
          %s149 = smul.u32 32, %s16
          %s150 = smul.u32 2, %s17
          %s151 = smul.addr %s149, 6
          %s152 = sadd.s32 %s150, %s151
          %s153 = smul.addr %s152, 4
          %s154 = scalar_lea.vmem %s0, %s153
          // Predicated region
          $region29: #{gcn_forward.3} parent=27 // pred_check
            _
          $region30: #{gcn_forward.3} parent=27 // pred_check_branch
            %156 = sbr.rel (0) target = $region32
          $region31: #{gcn_forward.3} parent=27 // pred_region
            // Predicated region
            $region33: #{gcn_forward.3} parent=31 // pred_check
              _
            $region34: #{gcn_forward.3} parent=31 // pred_check_branch
              %158 = sbr.rel (0) target = $region36
            $region35: #{gcn_forward.3} parent=31 // pred_region
              // Predicated region
              $region48: #{gcn_forward.3} parent=35 // pred_check
                _
              $region49: #{gcn_forward.3} parent=35 // pred_check_branch
                %235 = sbr.rel (0) target = $region51
              $region50: #{gcn_forward.3} parent=35 // pred_region
                loop: start=0, step=1, limit=1
                $region52: #{gcn_forward.3} parent=50 // loop_pre_header
                  _
                $region53: #{gcn_forward.3} parent=50 // loop_header
                  %s237 = sphi 0, %s241
                  %p238 = scmp.ge.s32.totalorder %s237, 1
                  %s242 = sphi %s154, %s154
                  %s243 = sphi %s148, %s148
                $region54: #{gcn_forward.3} parent=50 // loop_header_branch
                  %240 = sbr.rel (%p238) target = $region58
                $region55: #{gcn_forward.3} parent=50 // loop_body
                  %v244 = vld [vmem:[%s242] sm:$0xff]
                  %245 = vst [vmem:[%s243] sm:$0xff] %v244
                  %v246 = vld [vmem:[%s242 + $0x18] sm:$0xff]
                  %247 = vst [vmem:[%s243 + $0x8] sm:$0xff] %v246
                  %v248 = vld [vmem:[%s242 + $0x30] sm:$0xff]
                  %249 = vst [vmem:[%s243 + $0x10] sm:$0xff] %v248
                  %v250 = vld [vmem:[%s242 + $0x48] sm:$0xff]
                  %251 = vst [vmem:[%s243 + $0x18] sm:$0xff] %v250
                  %v252 = vld [vmem:[%s242 + $0x60] sm:$0xff]
                  %253 = vst [vmem:[%s243 + $0x20] sm:$0xff] %v252
                  %v254 = vld [vmem:[%s242 + $0x78] sm:$0xff]
                  %255 = vst [vmem:[%s243 + $0x28] sm:$0xff] %v254
                  %v256 = vld [vmem:[%s242 + $0x90] sm:$0xff]
                  %257 = vst [vmem:[%s243 + $0x30] sm:$0xff] %v256
                  %v258 = vld [vmem:[%s242 + $0xa8] sm:$0xff]
                  %259 = vst [vmem:[%s243 + $0x38] sm:$0xff] %v258
                  %v260 = vld [vmem:[%s242 + $0xc0] sm:$0xff]
                  %261 = vst [vmem:[%s243 + $0x40] sm:$0xff] %v260
                  %v262 = vld [vmem:[%s242 + $0xd8] sm:$0xff]
                  %263 = vst [vmem:[%s243 + $0x48] sm:$0xff] %v262
                  %v264 = vld [vmem:[%s242 + $0xf0] sm:$0xff]
                  %265 = vst [vmem:[%s243 + $0x50] sm:$0xff] %v264
                  %v266 = vld [vmem:[%s242 + $0x108] sm:$0xff]
                  %267 = vst [vmem:[%s243 + $0x58] sm:$0xff] %v266
                  %v268 = vld [vmem:[%s242 + $0x120] sm:$0xff]
                  %269 = vst [vmem:[%s243 + $0x60] sm:$0xff] %v268
                  %v270 = vld [vmem:[%s242 + $0x138] sm:$0xff]
                  %271 = vst [vmem:[%s243 + $0x68] sm:$0xff] %v270
                  %v272 = vld [vmem:[%s242 + $0x150] sm:$0xff]
                  %273 = vst [vmem:[%s243 + $0x70] sm:$0xff] %v272
                  %v274 = vld [vmem:[%s242 + $0x168] sm:$0xff]
                  %275 = vst [vmem:[%s243 + $0x78] sm:$0xff] %v274
                  %v276 = vld [vmem:[%s242 + $0x180] sm:$0xff]
                  %277 = vst [vmem:[%s243 + $0x80] sm:$0xff] %v276
                  %v278 = vld [vmem:[%s242 + $0x198] sm:$0xff]
                  %279 = vst [vmem:[%s243 + $0x88] sm:$0xff] %v278
                  %v280 = vld [vmem:[%s242 + $0x1b0] sm:$0xff]
                  %281 = vst [vmem:[%s243 + $0x90] sm:$0xff] %v280
                  %v282 = vld [vmem:[%s242 + $0x1c8] sm:$0xff]
                  %283 = vst [vmem:[%s243 + $0x98] sm:$0xff] %v282
                  %v284 = vld [vmem:[%s242 + $0x1e0] sm:$0xff]
                  %285 = vst [vmem:[%s243 + $0xa0] sm:$0xff] %v284
                  %v286 = vld [vmem:[%s242 + $0x1f8] sm:$0xff]
                  %287 = vst [vmem:[%s243 + $0xa8] sm:$0xff] %v286
                  %v288 = vld [vmem:[%s242 + $0x210] sm:$0xff]
                  %289 = vst [vmem:[%s243 + $0xb0] sm:$0xff] %v288
                  %v290 = vld [vmem:[%s242 + $0x228] sm:$0xff]
                  %291 = vst [vmem:[%s243 + $0xb8] sm:$0xff] %v290
                  %v292 = vld [vmem:[%s242 + $0x240] sm:$0xff]
                  %293 = vst [vmem:[%s243 + $0xc0] sm:$0xff] %v292
                  %v294 = vld [vmem:[%s242 + $0x258] sm:$0xff]
                  %295 = vst [vmem:[%s243 + $0xc8] sm:$0xff] %v294
                  %v296 = vld [vmem:[%s242 + $0x270] sm:$0xff]
                  %297 = vst [vmem:[%s243 + $0xd0] sm:$0xff] %v296
                  %v298 = vld [vmem:[%s242 + $0x288] sm:$0xff]
                  %299 = vst [vmem:[%s243 + $0xd8] sm:$0xff] %v298
                  %v300 = vld [vmem:[%s242 + $0x2a0] sm:$0xff]
                  %301 = vst [vmem:[%s243 + $0xe0] sm:$0xff] %v300
                  %v302 = vld [vmem:[%s242 + $0x2b8] sm:$0xff]
                  %303 = vst [vmem:[%s243 + $0xe8] sm:$0xff] %v302
                  %v304 = vld [vmem:[%s242 + $0x2d0] sm:$0xff]
                  %305 = vst [vmem:[%s243 + $0xf0] sm:$0xff] %v304
                  %v306 = vld [vmem:[%s242 + $0x2e8] sm:$0xff]
                  %307 = vst [vmem:[%s243 + $0xf8] sm:$0xff] %v306
                $region56: #{gcn_forward.3} parent=50 // loop_footer
                  %s241 = sadd.s32 1, %s237
                $region57: #{gcn_forward.3} parent=50 // loop_footer_branch
                  %236 = sbr.rel target = $region53
                $region58: #{gcn_forward.3} parent=50 // loop_exit
                  _
              $region51: #{gcn_forward.3} parent=35 // pred_fallthru
                _
              // Predicated region
              $region59: #{gcn_forward.3} parent=35 // pred_check
                _
              $region60: #{gcn_forward.3} parent=35 // pred_check_branch
                %309 = sbr.rel target = $region62
              $region61: #{gcn_forward.3} parent=35 // pred_region
                _
              $region62: #{gcn_forward.3} parent=35 // pred_fallthru
                _
            $region36: #{gcn_forward.3} parent=31 // pred_fallthru
              _
            // Predicated region
            $region37: #{gcn_forward.3} parent=31 // pred_check
              _
            $region38: #{gcn_forward.3} parent=31 // pred_check_branch
              %160 = sbr.rel target = $region40
            $region39: #{gcn_forward.3} parent=31 // pred_region
              loop: start=0, step=1, limit=1
              $region41: #{gcn_forward.3} parent=39 // loop_pre_header
                _
              $region42: #{gcn_forward.3} parent=39 // loop_header
                %s163 = sphi 0, %s167
                %p164 = scmp.ge.s32.totalorder %s163, 1
                %s168 = sphi %s154, %s154
                %s169 = sphi %s148, %s148
              $region43: #{gcn_forward.3} parent=39 // loop_header_branch
                %166 = sbr.rel (%p164) target = $region47
              $region44: #{gcn_forward.3} parent=39 // loop_body
                %v170 = vld [vmem:[%s168] sm:$0xff]
                %171 = vst [vmem:[%s169] sm:$0xff] %v170
                %v172 = vld [vmem:[%s168 + $0x18] sm:$0xff]
                %173 = vst [vmem:[%s169 + $0x8] sm:$0xff] %v172
                %v174 = vld [vmem:[%s168 + $0x30] sm:$0xff]
                %175 = vst [vmem:[%s169 + $0x10] sm:$0xff] %v174
                %v176 = vld [vmem:[%s168 + $0x48] sm:$0xff]
                %177 = vst [vmem:[%s169 + $0x18] sm:$0xff] %v176
                %v178 = vld [vmem:[%s168 + $0x60] sm:$0xff]
                %179 = vst [vmem:[%s169 + $0x20] sm:$0xff] %v178
                %v180 = vld [vmem:[%s168 + $0x78] sm:$0xff]
                %181 = vst [vmem:[%s169 + $0x28] sm:$0xff] %v180
                %v182 = vld [vmem:[%s168 + $0x90] sm:$0xff]
                %183 = vst [vmem:[%s169 + $0x30] sm:$0xff] %v182
                %v184 = vld [vmem:[%s168 + $0xa8] sm:$0xff]
                %185 = vst [vmem:[%s169 + $0x38] sm:$0xff] %v184
                %v186 = vld [vmem:[%s168 + $0xc0] sm:$0xff]
                %187 = vst [vmem:[%s169 + $0x40] sm:$0xff] %v186
                %v188 = vld [vmem:[%s168 + $0xd8] sm:$0xff]
                %189 = vst [vmem:[%s169 + $0x48] sm:$0xff] %v188
                %v190 = vld [vmem:[%s168 + $0xf0] sm:$0xff]
                %191 = vst [vmem:[%s169 + $0x50] sm:$0xff] %v190
                %v192 = vld [vmem:[%s168 + $0x108] sm:$0xff]
                %193 = vst [vmem:[%s169 + $0x58] sm:$0xff] %v192
                %v194 = vld [vmem:[%s168 + $0x120] sm:$0xff]
                %195 = vst [vmem:[%s169 + $0x60] sm:$0xff] %v194
                %v196 = vld [vmem:[%s168 + $0x138] sm:$0xff]
                %197 = vst [vmem:[%s169 + $0x68] sm:$0xff] %v196
                %v198 = vld [vmem:[%s168 + $0x150] sm:$0xff]
                %199 = vst [vmem:[%s169 + $0x70] sm:$0xff] %v198
                %v200 = vld [vmem:[%s168 + $0x168] sm:$0xff]
                %201 = vst [vmem:[%s169 + $0x78] sm:$0xff] %v200
                %v202 = vld [vmem:[%s168 + $0x180] sm:$0xff]
                %203 = vst [vmem:[%s169 + $0x80] sm:$0xff] %v202
                %v204 = vld [vmem:[%s168 + $0x198] sm:$0xff]
                %205 = vst [vmem:[%s169 + $0x88] sm:$0xff] %v204
                %v206 = vld [vmem:[%s168 + $0x1b0] sm:$0xff]
                %207 = vst [vmem:[%s169 + $0x90] sm:$0xff] %v206
                %v208 = vld [vmem:[%s168 + $0x1c8] sm:$0xff]
                %209 = vst [vmem:[%s169 + $0x98] sm:$0xff] %v208
                %v210 = vld [vmem:[%s168 + $0x1e0] sm:$0xff]
                %211 = vst [vmem:[%s169 + $0xa0] sm:$0xff] %v210
                %v212 = vld [vmem:[%s168 + $0x1f8] sm:$0xff]
                %213 = vst [vmem:[%s169 + $0xa8] sm:$0xff] %v212
                %v214 = vld [vmem:[%s168 + $0x210] sm:$0xff]
                %215 = vst [vmem:[%s169 + $0xb0] sm:$0xff] %v214
                %v216 = vld [vmem:[%s168 + $0x228] sm:$0xff]
                %217 = vst [vmem:[%s169 + $0xb8] sm:$0xff] %v216
                %v218 = vld [vmem:[%s168 + $0x240] sm:$0xff]
                %219 = vst [vmem:[%s169 + $0xc0] sm:$0xff] %v218
                %v220 = vld [vmem:[%s168 + $0x258] sm:$0xff]
                %221 = vst [vmem:[%s169 + $0xc8] sm:$0xff] %v220
                %v222 = vld [vmem:[%s168 + $0x270] sm:$0xff]
                %223 = vst [vmem:[%s169 + $0xd0] sm:$0xff] %v222
                %v224 = vld [vmem:[%s168 + $0x288] sm:$0xff]
                %225 = vst [vmem:[%s169 + $0xd8] sm:$0xff] %v224
                %v226 = vld [vmem:[%s168 + $0x2a0] sm:$0xff]
                %227 = vst [vmem:[%s169 + $0xe0] sm:$0xff] %v226
                %v228 = vld [vmem:[%s168 + $0x2b8] sm:$0xff]
                %229 = vst [vmem:[%s169 + $0xe8] sm:$0xff] %v228
                %v230 = vld [vmem:[%s168 + $0x2d0] sm:$0xff]
                %231 = vst [vmem:[%s169 + $0xf0] sm:$0xff] %v230
                %v232 = vld [vmem:[%s168 + $0x2e8] sm:$0xff]
                %233 = vst [vmem:[%s169 + $0xf8] sm:$0xff] %v232
              $region45: #{gcn_forward.3} parent=39 // loop_footer
                %s167 = sadd.s32 1, %s163
              $region46: #{gcn_forward.3} parent=39 // loop_footer_branch
                %162 = sbr.rel target = $region42
              $region47: #{gcn_forward.3} parent=39 // loop_exit
                _
            $region40: #{gcn_forward.3} parent=31 // pred_fallthru
              _
          $region32: #{gcn_forward.3} parent=27 // pred_fallthru
            _
          %310 = vnop
        $region28: #{gcn_forward.3} parent=23 // pred_fallthru
          _
      $region24: #{gcn_forward.3} parent=5 // pred_fallthru
        _
      %p311 = scmp.le.s32.totalorder 1, %s9
      %p312 = scmp.lt.s32.totalorder %s9, 10
      %p313 = pnand %p311, %p312
      %p314 = pneg %p313
      // Predicated region
      $region63: #{gcn_forward.3} parent=5 // pred_check
        _
      $region64: #{gcn_forward.3} parent=5 // pred_check_branch
        %316 = sbr.rel (%p313) target = $region66
      $region65: #{gcn_forward.3} parent=5 // pred_region
        %s317 = ssub.s32 %s9, 1
        %s318 = sand.u32 %s36, 1
        %s319 = sand.u32 %s36, 1
        %s320 = smul.addr %s319, 256
        %s321 = scalar_lea.vmem [#allocation2], %s320
        // Predicated region
        $region67: #{gcn_forward.3} parent=65 // pred_check
          %p322 = pneg %p49
        $region68: #{gcn_forward.3} parent=65 // pred_check_branch
          %324 = sbr.rel (%p322) target = $region70
        $region69: #{gcn_forward.3} parent=65 // pred_region
          _
        $region70: #{gcn_forward.3} parent=65 // pred_fallthru
          _
        %s325 = sand.u32 %s36, 1
        %s326 = sand.u32 %s36, 1
        %s327 = smul.addr %s326, 256
        %s328 = scalar_lea.vmem [#allocation2], %s327
        %p329 = pneg %p49
        %p330 = pneg %p46
        %p331 = pneg %p70
        %p332 = pneg %p67
        %p333 = pneg %p91
        %p334 = pneg %p88
        %p335 = pneg %p117
        %p336 = pneg %p114
        %s337 = smul.u32 32, %s18
        %p338 = scmp.lt.s32.totalorder %s337, 95
        %s339 = scalar_select %p338, %s337, 95
        %s340 = smul.addr %s339, 8
        %s341 = scalar_lea.vmem %s3, %s340
        %s342 = smul.u32 32, %s18
        %s343 = smul.u32 2, %s19
        %s344 = smul.u32 32, %s18
        %p345 = scmp.lt.s32.totalorder %s344, 95
        %s346 = scalar_select %p345, %s344, 95
        %s347 = smul.addr %s346, 8
        %s348 = scalar_lea.vmem %s3, %s347
        %s349 = smul.u32 32, %s18
        %p351 = scmp.eq.s32.totalorder %s19, 0
        // Predicated region
        $region71: #{gcn_forward.3} parent=65 // pred_check
          %p352 = pneg %p351
        $region72: #{gcn_forward.3} parent=65 // pred_check_branch
          %354 = sbr.rel (%p352) target = $region74
        $region73: #{gcn_forward.3} parent=65 // pred_region
          %355 = vst [vmem:[%s348] sm:$0xff] 0.0
          %356 = vst [vmem:[%s348 + $0x8] sm:$0xff] 0.0
          %357 = vst [vmem:[%s348 + $0x10] sm:$0xff] 0.0
          %358 = vst [vmem:[%s348 + $0x18] sm:$0xff] 0.0
          %359 = vst [vmem:[%s348 + $0x20] sm:$0xff] 0.0
          %360 = vst [vmem:[%s348 + $0x28] sm:$0xff] 0.0
          %361 = vst [vmem:[%s348 + $0x30] sm:$0xff] 0.0
          %362 = vst [vmem:[%s348 + $0x38] sm:$0xff] 0.0
          %363 = vst [vmem:[%s348 + $0x40] sm:$0xff] 0.0
          %364 = vst [vmem:[%s348 + $0x48] sm:$0xff] 0.0
          %365 = vst [vmem:[%s348 + $0x50] sm:$0xff] 0.0
          %366 = vst [vmem:[%s348 + $0x58] sm:$0xff] 0.0
          %367 = vst [vmem:[%s348 + $0x60] sm:$0xff] 0.0
          %368 = vst [vmem:[%s348 + $0x68] sm:$0xff] 0.0
          %369 = vst [vmem:[%s348 + $0x70] sm:$0xff] 0.0
          %370 = vst [vmem:[%s348 + $0x78] sm:$0xff] 0.0
          %371 = vst [vmem:[%s348 + $0x80] sm:$0xff] 0.0
          %372 = vst [vmem:[%s348 + $0x88] sm:$0xff] 0.0
          %373 = vst [vmem:[%s348 + $0x90] sm:$0xff] 0.0
          %374 = vst [vmem:[%s348 + $0x98] sm:$0xff] 0.0
          %375 = vst [vmem:[%s348 + $0xa0] sm:$0xff] 0.0
          %376 = vst [vmem:[%s348 + $0xa8] sm:$0xff] 0.0
          %377 = vst [vmem:[%s348 + $0xb0] sm:$0xff] 0.0
          %378 = vst [vmem:[%s348 + $0xb8] sm:$0xff] 0.0
          %379 = vst [vmem:[%s348 + $0xc0] sm:$0xff] 0.0
          %380 = vst [vmem:[%s348 + $0xc8] sm:$0xff] 0.0
          %381 = vst [vmem:[%s348 + $0xd0] sm:$0xff] 0.0
          %382 = vst [vmem:[%s348 + $0xd8] sm:$0xff] 0.0
          %383 = vst [vmem:[%s348 + $0xe0] sm:$0xff] 0.0
          %384 = vst [vmem:[%s348 + $0xe8] sm:$0xff] 0.0
          %385 = vst [vmem:[%s348 + $0xf0] sm:$0xff] 0.0
          %386 = vst [vmem:[%s348 + $0xf8] sm:$0xff] 0.0
        $region74: #{gcn_forward.3} parent=65 // pred_fallthru
          _
        %s387 = smul.u32 %s19, 256
        %v388 = vld [vmem:[%s348] sm:$0xff]
        %v389 = vld [vmem:[%s348 + $0x8] sm:$0xff]
        %v390 = vld [vmem:[%s348 + $0x10] sm:$0xff]
        %v391 = vld [vmem:[%s348 + $0x18] sm:$0xff]
        %v392 = vld [vmem:[%s348 + $0x20] sm:$0xff]
        %v393 = vld [vmem:[%s348 + $0x28] sm:$0xff]
        %v394 = vld [vmem:[%s348 + $0x30] sm:$0xff]
        %v395 = vld [vmem:[%s348 + $0x38] sm:$0xff]
        %v396 = vld [vmem:[%s348 + $0x40] sm:$0xff]
        %v397 = vld [vmem:[%s348 + $0x48] sm:$0xff]
        %v398 = vld [vmem:[%s348 + $0x50] sm:$0xff]
        %v399 = vld [vmem:[%s348 + $0x58] sm:$0xff]
        %v400 = vld [vmem:[%s348 + $0x60] sm:$0xff]
        %v401 = vld [vmem:[%s348 + $0x68] sm:$0xff]
        %v402 = vld [vmem:[%s348 + $0x70] sm:$0xff]
        %v403 = vld [vmem:[%s348 + $0x78] sm:$0xff]
        %v404 = vld [vmem:[%s348 + $0x80] sm:$0xff]
        %v405 = vld [vmem:[%s348 + $0x88] sm:$0xff]
        %v406 = vld [vmem:[%s348 + $0x90] sm:$0xff]
        %v407 = vld [vmem:[%s348 + $0x98] sm:$0xff]
        %v408 = vld [vmem:[%s348 + $0xa0] sm:$0xff]
        %v409 = vld [vmem:[%s348 + $0xa8] sm:$0xff]
        %v410 = vld [vmem:[%s348 + $0xb0] sm:$0xff]
        %v411 = vld [vmem:[%s348 + $0xb8] sm:$0xff]
        %v412 = vld [vmem:[%s348 + $0xc0] sm:$0xff]
        %v413 = vld [vmem:[%s348 + $0xc8] sm:$0xff]
        %v414 = vld [vmem:[%s348 + $0xd0] sm:$0xff]
        %v415 = vld [vmem:[%s348 + $0xd8] sm:$0xff]
        %v416 = vld [vmem:[%s348 + $0xe0] sm:$0xff]
        %v417 = vld [vmem:[%s348 + $0xe8] sm:$0xff]
        %v418 = vld [vmem:[%s348 + $0xf0] sm:$0xff]
        %v419 = vld [vmem:[%s348 + $0xf8] sm:$0xff]
        %v420 = vld [vmem:[%s321] sm:$0xff]
        %v421 = vld [vmem:[%s321 + $0x8] sm:$0xff]
        %v422 = vld [vmem:[%s321 + $0x10] sm:$0xff]
        %v423 = vld [vmem:[%s321 + $0x18] sm:$0xff]
        %v424 = vld [vmem:[%s321 + $0x20] sm:$0xff]
        %v425 = vld [vmem:[%s321 + $0x28] sm:$0xff]
        %v426 = vld [vmem:[%s321 + $0x30] sm:$0xff]
        %v427 = vld [vmem:[%s321 + $0x38] sm:$0xff]
        %v428 = vld [vmem:[%s321 + $0x40] sm:$0xff]
        %v429 = vld [vmem:[%s321 + $0x48] sm:$0xff]
        %v430 = vld [vmem:[%s321 + $0x50] sm:$0xff]
        %v431 = vld [vmem:[%s321 + $0x58] sm:$0xff]
        %v432 = vld [vmem:[%s321 + $0x60] sm:$0xff]
        %v433 = vld [vmem:[%s321 + $0x68] sm:$0xff]
        %v434 = vld [vmem:[%s321 + $0x70] sm:$0xff]
        %v435 = vld [vmem:[%s321 + $0x78] sm:$0xff]
        %v436 = vld [vmem:[%s321 + $0x80] sm:$0xff]
        %v437 = vld [vmem:[%s321 + $0x88] sm:$0xff]
        %v438 = vld [vmem:[%s321 + $0x90] sm:$0xff]
        %v439 = vld [vmem:[%s321 + $0x98] sm:$0xff]
        %v440 = vld [vmem:[%s321 + $0xa0] sm:$0xff]
        %v441 = vld [vmem:[%s321 + $0xa8] sm:$0xff]
        %v442 = vld [vmem:[%s321 + $0xb0] sm:$0xff]
        %v443 = vld [vmem:[%s321 + $0xb8] sm:$0xff]
        %v444 = vld [vmem:[%s321 + $0xc0] sm:$0xff]
        %v445 = vld [vmem:[%s321 + $0xc8] sm:$0xff]
        %v446 = vld [vmem:[%s321 + $0xd0] sm:$0xff]
        %v447 = vld [vmem:[%s321 + $0xd8] sm:$0xff]
        %v448 = vld [vmem:[%s321 + $0xe0] sm:$0xff]
        %v449 = vld [vmem:[%s321 + $0xe8] sm:$0xff]
        %v450 = vld [vmem:[%s321 + $0xf0] sm:$0xff]
        %v451 = vld [vmem:[%s321 + $0xf8] sm:$0xff]
        %s452 = sshra.s32 %s387, 3
        %s453 = sand.u32 %s387, 7
        %s454 = smul.addr %s452, 4
        %s455 = scalar_lea.vmem %s1, %s454
        %v456 = vld [vmem:[%s455] sm:$0xf]
        %v457 = vld [vmem:[%s455 + $0x4] sm:$0xf]
        %v458 = vld [vmem:[%s455 + $0x8] sm:$0xf]
        %v459 = vld [vmem:[%s455 + $0xc] sm:$0xf]
        %v460 = vld [vmem:[%s455 + $0x10] sm:$0xf]
        %v461 = vld [vmem:[%s455 + $0x14] sm:$0xf]
        %v462 = vld [vmem:[%s455 + $0x18] sm:$0xf]
        %v463 = vld [vmem:[%s455 + $0x1c] sm:$0xf]
        %v464 = vld [vmem:[%s455 + $0x20] sm:$0xf]
        %v465 = vld [vmem:[%s455 + $0x24] sm:$0xf]
        %v466 = vld [vmem:[%s455 + $0x28] sm:$0xf]
        %v467 = vld [vmem:[%s455 + $0x2c] sm:$0xf]
        %v468 = vld [vmem:[%s455 + $0x30] sm:$0xf]
        %v469 = vld [vmem:[%s455 + $0x34] sm:$0xf]
        %v470 = vld [vmem:[%s455 + $0x38] sm:$0xf]
        %v471 = vld [vmem:[%s455 + $0x3c] sm:$0xf]
        %v472 = vld [vmem:[%s455 + $0x40] sm:$0xf]
        %v473 = vld [vmem:[%s455 + $0x44] sm:$0xf]
        %v474 = vld [vmem:[%s455 + $0x48] sm:$0xf]
        %v475 = vld [vmem:[%s455 + $0x4c] sm:$0xf]
        %v476 = vld [vmem:[%s455 + $0x50] sm:$0xf]
        %v477 = vld [vmem:[%s455 + $0x54] sm:$0xf]
        %v478 = vld [vmem:[%s455 + $0x58] sm:$0xf]
        %v479 = vld [vmem:[%s455 + $0x5c] sm:$0xf]
        %v480 = vld [vmem:[%s455 + $0x60] sm:$0xf]
        %v481 = vld [vmem:[%s455 + $0x64] sm:$0xf]
        %v482 = vld [vmem:[%s455 + $0x68] sm:$0xf]
        %v483 = vld [vmem:[%s455 + $0x6c] sm:$0xf]
        %v484 = vld [vmem:[%s455 + $0x70] sm:$0xf]
        %v485 = vld [vmem:[%s455 + $0x74] sm:$0xf]
        %v486 = vld [vmem:[%s455 + $0x78] sm:$0xf]
        %v487 = vld [vmem:[%s455 + $0x7c] sm:$0xf]
        %v520 = vunpack.c.l.b16 %v420
        %v521 = vunpack.c.h.b16 %v420
        %v522 = vunpack.c.l.b16 %v421
        %v523 = vunpack.c.h.b16 %v421
        %v524 = vunpack.c.l.b16 %v422
        %v525 = vunpack.c.h.b16 %v422
        %v526 = vunpack.c.l.b16 %v423
        %v527 = vunpack.c.h.b16 %v423
        %v528 = vunpack.c.l.b16 %v424
        %v529 = vunpack.c.h.b16 %v424
        %v530 = vunpack.c.l.b16 %v425
        %v531 = vunpack.c.h.b16 %v425
        %v532 = vunpack.c.l.b16 %v426
        %v533 = vunpack.c.h.b16 %v426
        %v534 = vunpack.c.l.b16 %v427
        %v535 = vunpack.c.h.b16 %v427
        %v536 = vunpack.c.l.b16 %v428
        %v537 = vunpack.c.h.b16 %v428
        %v538 = vunpack.c.l.b16 %v429
        %v539 = vunpack.c.h.b16 %v429
        %v540 = vunpack.c.l.b16 %v430
        %v541 = vunpack.c.h.b16 %v430
        %v542 = vunpack.c.l.b16 %v431
        %v543 = vunpack.c.h.b16 %v431
        %v544 = vunpack.c.l.b16 %v432
        %v545 = vunpack.c.h.b16 %v432
        %v546 = vunpack.c.l.b16 %v433
        %v547 = vunpack.c.h.b16 %v433
        %v548 = vunpack.c.l.b16 %v434
        %v549 = vunpack.c.h.b16 %v434
        %v550 = vunpack.c.l.b16 %v435
        %v551 = vunpack.c.h.b16 %v435
        %v552 = vunpack.c.l.b16 %v436
        %v553 = vunpack.c.h.b16 %v436
        %v554 = vunpack.c.l.b16 %v437
        %v555 = vunpack.c.h.b16 %v437
        %v556 = vunpack.c.l.b16 %v438
        %v557 = vunpack.c.h.b16 %v438
        %v558 = vunpack.c.l.b16 %v439
        %v559 = vunpack.c.h.b16 %v439
        %v560 = vunpack.c.l.b16 %v440
        %v561 = vunpack.c.h.b16 %v440
        %v562 = vunpack.c.l.b16 %v441
        %v563 = vunpack.c.h.b16 %v441
        %v564 = vunpack.c.l.b16 %v442
        %v565 = vunpack.c.h.b16 %v442
        %v566 = vunpack.c.l.b16 %v443
        %v567 = vunpack.c.h.b16 %v443
        %v568 = vunpack.c.l.b16 %v444
        %v569 = vunpack.c.h.b16 %v444
        %v570 = vunpack.c.l.b16 %v445
        %v571 = vunpack.c.h.b16 %v445
        %v572 = vunpack.c.l.b16 %v446
        %v573 = vunpack.c.h.b16 %v446
        %v574 = vunpack.c.l.b16 %v447
        %v575 = vunpack.c.h.b16 %v447
        %v576 = vunpack.c.l.b16 %v448
        %v577 = vunpack.c.h.b16 %v448
        %v578 = vunpack.c.l.b16 %v449
        %v579 = vunpack.c.h.b16 %v449
        %v580 = vunpack.c.l.b16 %v450
        %v581 = vunpack.c.h.b16 %v450
        %v582 = vunpack.c.l.b16 %v451
        %v583 = vunpack.c.h.b16 %v451
        %v584 = vpack.c.b16 %v522, %v520
        %v585 = vpack.c.b16 %v523, %v521
        %v586 = vpack.c.b16 %v526, %v524
        %v587 = vpack.c.b16 %v527, %v525
        %v588 = vpack.c.b16 %v530, %v528
        %v589 = vpack.c.b16 %v531, %v529
        %v590 = vpack.c.b16 %v534, %v532
        %v591 = vpack.c.b16 %v535, %v533
        %v592 = vpack.c.b16 %v538, %v536
        %v593 = vpack.c.b16 %v539, %v537
        %v594 = vpack.c.b16 %v542, %v540
        %v595 = vpack.c.b16 %v543, %v541
        %v596 = vpack.c.b16 %v546, %v544
        %v597 = vpack.c.b16 %v547, %v545
        %v598 = vpack.c.b16 %v550, %v548
        %v599 = vpack.c.b16 %v551, %v549
        %v600 = vpack.c.b16 %v554, %v552
        %v601 = vpack.c.b16 %v555, %v553
        %v602 = vpack.c.b16 %v558, %v556
        %v603 = vpack.c.b16 %v559, %v557
        %v604 = vpack.c.b16 %v562, %v560
        %v605 = vpack.c.b16 %v563, %v561
        %v606 = vpack.c.b16 %v566, %v564
        %v607 = vpack.c.b16 %v567, %v565
        %v608 = vpack.c.b16 %v570, %v568
        %v609 = vpack.c.b16 %v571, %v569
        %v610 = vpack.c.b16 %v574, %v572
        %v611 = vpack.c.b16 %v575, %v573
        %v612 = vpack.c.b16 %v578, %v576
        %v613 = vpack.c.b16 %v579, %v577
        %v614 = vpack.c.b16 %v582, %v580
        %v615 = vpack.c.b16 %v583, %v581
        %v680 = vunpack.c.l.b16 %v456
        %v681 = vunpack.c.l.b16 %v457
        %v682 = vunpack.c.l.b16 %v458
        %v683 = vunpack.c.l.b16 %v459
        %v684 = vunpack.c.l.b16 %v460
        %v685 = vunpack.c.l.b16 %v461
        %v686 = vunpack.c.l.b16 %v462
        %v687 = vunpack.c.l.b16 %v463
        %v688 = vunpack.c.l.b16 %v464
        %v689 = vunpack.c.l.b16 %v465
        %v690 = vunpack.c.l.b16 %v466
        %v691 = vunpack.c.l.b16 %v467
        %v692 = vunpack.c.l.b16 %v468
        %v693 = vunpack.c.l.b16 %v469
        %v694 = vunpack.c.l.b16 %v470
        %v695 = vunpack.c.l.b16 %v471
        %v696 = vunpack.c.l.b16 %v472
        %v697 = vunpack.c.l.b16 %v473
        %v698 = vunpack.c.l.b16 %v474
        %v699 = vunpack.c.l.b16 %v475
        %v700 = vunpack.c.l.b16 %v476
        %v701 = vunpack.c.l.b16 %v477
        %v702 = vunpack.c.l.b16 %v478
        %v703 = vunpack.c.l.b16 %v479
        %v704 = vunpack.c.l.b16 %v480
        %v705 = vunpack.c.l.b16 %v481
        %v706 = vunpack.c.l.b16 %v482
        %v707 = vunpack.c.l.b16 %v483
        %v708 = vunpack.c.l.b16 %v484
        %v709 = vunpack.c.l.b16 %v485
        %v710 = vunpack.c.l.b16 %v486
        %v711 = vunpack.c.l.b16 %v487
        %v712 = vpack.c.b16 %v681, %v680
        %v713 = vpack.c.b16 %v683, %v682
        %v714 = vpack.c.b16 %v685, %v684
        %v715 = vpack.c.b16 %v687, %v686
        %v716 = vpack.c.b16 %v689, %v688
        %v717 = vpack.c.b16 %v691, %v690
        %v718 = vpack.c.b16 %v693, %v692
        %v719 = vpack.c.b16 %v695, %v694
        %v720 = vpack.c.b16 %v697, %v696
        %v721 = vpack.c.b16 %v699, %v698
        %v722 = vpack.c.b16 %v701, %v700
        %v723 = vpack.c.b16 %v703, %v702
        %v724 = vpack.c.b16 %v705, %v704
        %v725 = vpack.c.b16 %v707, %v706
        %v726 = vpack.c.b16 %v709, %v708
        %v727 = vpack.c.b16 %v711, %v710
        %744 = vmatprep.subr.bf16.mxu0 0
        %745 = vmatpush1.bf16.msra.mxu0 %v712
        %746 = vmatprep.subr.bf16.mxu0 0
        %747 = vmatpush1.bf16.msra.mxu0 %v713
        %748 = vmatprep.subr.bf16.mxu0 0
        %749 = vmatpush1.bf16.msra.mxu0 %v714
        %750 = vmatprep.subr.bf16.mxu0 0
        %751 = vmatpush1.bf16.msra.mxu0 %v715
        %752 = vmatprep.subr.bf16.mxu0 0
        %753 = vmatpush1.bf16.msra.mxu0 %v716
        %754 = vmatprep.subr.bf16.mxu0 0
        %755 = vmatpush1.bf16.msra.mxu0 %v717
        %756 = vmatprep.subr.bf16.mxu0 0
        %757 = vmatpush1.bf16.msra.mxu0 %v718
        %758 = vmatprep.subr.bf16.mxu0 0
        %759 = vmatpush1.bf16.msra.mxu0 %v719
        %760 = vmatprep.subr.bf16.mxu0 0
        %761 = vmatpush1.bf16.msra.mxu0 %v720
        %762 = vmatprep.subr.bf16.mxu0 0
        %763 = vmatpush1.bf16.msra.mxu0 %v721
        %764 = vmatprep.subr.bf16.mxu0 0
        %765 = vmatpush1.bf16.msra.mxu0 %v722
        %766 = vmatprep.subr.bf16.mxu0 0
        %767 = vmatpush1.bf16.msra.mxu0 %v723
        %768 = vmatprep.subr.bf16.mxu0 0
        %769 = vmatpush1.bf16.msra.mxu0 %v724
        %770 = vmatprep.subr.bf16.mxu0 0
        %771 = vmatpush1.bf16.msra.mxu0 %v725
        %772 = vmatprep.subr.bf16.mxu0 0
        %773 = vmatpush1.bf16.msra.mxu0 %v726
        %774 = vmatprep.subr.bf16.mxu0 0
        %775 = vmatpush1.bf16.msra.mxu0 %v727
        %776 = vmatprep.mubr.bf16.mxu0 %v585
        %777 = vmatmul.mubr.bf16.gmra.mrb[0].mxu0 %v584
        %v778 = vpop.f32.mrb[0].mxu0
        %v779 = vadd.f32 0.0, %v778
        %v780 = vpop.f32.mrb[0].mxu0
        %v781 = vpop.f32.mrb[0].mxu0
        %v782 = vadd.f32 0.0, %v781
        %v783 = vpop.f32.mrb[0].mxu0
        %784 = vmatprep.mubr.bf16.mxu0 %v587
        %785 = vmatmul.mubr.bf16.gmra.mrb[0].mxu0 %v586
        %v786 = vpop.f32.mrb[0].mxu0
        %v787 = vadd.f32 0.0, %v786
        %v788 = vpop.f32.mrb[0].mxu0
        %v789 = vpop.f32.mrb[0].mxu0
        %v790 = vadd.f32 0.0, %v789
        %v791 = vpop.f32.mrb[0].mxu0
        %792 = vmatprep.mubr.bf16.mxu0 %v589
        %793 = vmatmul.mubr.bf16.gmra.mrb[0].mxu0 %v588
        %v794 = vpop.f32.mrb[0].mxu0
        %v795 = vadd.f32 0.0, %v794
        %v796 = vpop.f32.mrb[0].mxu0
        %v797 = vpop.f32.mrb[0].mxu0
        %v798 = vadd.f32 0.0, %v797
        %v799 = vpop.f32.mrb[0].mxu0
        %800 = vmatprep.mubr.bf16.mxu0 %v591
        %801 = vmatmul.mubr.bf16.gmra.mrb[0].mxu0 %v590
        %v802 = vpop.f32.mrb[0].mxu0
        %v803 = vadd.f32 0.0, %v802
        %v804 = vpop.f32.mrb[0].mxu0
        %v805 = vpop.f32.mrb[0].mxu0
        %v806 = vadd.f32 0.0, %v805
        %v807 = vpop.f32.mrb[0].mxu0
        %808 = vmatprep.mubr.bf16.mxu0 %v593
        %809 = vmatmul.mubr.bf16.gmra.mrb[0].mxu0 %v592
        %v810 = vpop.f32.mrb[0].mxu0
        %v811 = vadd.f32 0.0, %v810
        %v812 = vpop.f32.mrb[0].mxu0
        %v813 = vpop.f32.mrb[0].mxu0
        %v814 = vadd.f32 0.0, %v813
        %v815 = vpop.f32.mrb[0].mxu0
        %816 = vmatprep.mubr.bf16.mxu0 %v595
        %817 = vmatmul.mubr.bf16.gmra.mrb[0].mxu0 %v594
        %v818 = vpop.f32.mrb[0].mxu0
        %v819 = vadd.f32 0.0, %v818
        %v820 = vpop.f32.mrb[0].mxu0
        %v821 = vpop.f32.mrb[0].mxu0
        %v822 = vadd.f32 0.0, %v821
        %v823 = vpop.f32.mrb[0].mxu0
        %824 = vmatprep.mubr.bf16.mxu0 %v597
        %825 = vmatmul.mubr.bf16.gmra.mrb[0].mxu0 %v596
        %v826 = vpop.f32.mrb[0].mxu0
        %v827 = vadd.f32 0.0, %v826
        %v828 = vpop.f32.mrb[0].mxu0
        %v829 = vpop.f32.mrb[0].mxu0
        %v830 = vadd.f32 0.0, %v829
        %v831 = vpop.f32.mrb[0].mxu0
        %832 = vmatprep.mubr.bf16.mxu0 %v599
        %833 = vmatmul.mubr.bf16.gmra.mrb[0].mxu0 %v598
        %v834 = vpop.f32.mrb[0].mxu0
        %v835 = vadd.f32 0.0, %v834
        %v836 = vpop.f32.mrb[0].mxu0
        %v837 = vpop.f32.mrb[0].mxu0
        %v838 = vadd.f32 0.0, %v837
        %v839 = vpop.f32.mrb[0].mxu0
        %840 = vmatprep.mubr.bf16.mxu0 %v601
        %841 = vmatmul.mubr.bf16.gmra.mrb[0].mxu0 %v600
        %v842 = vpop.f32.mrb[0].mxu0
        %v843 = vadd.f32 0.0, %v842
        %v844 = vpop.f32.mrb[0].mxu0
        %v845 = vpop.f32.mrb[0].mxu0
        %v846 = vadd.f32 0.0, %v845
        %v847 = vpop.f32.mrb[0].mxu0
        %848 = vmatprep.mubr.bf16.mxu0 %v603
        %849 = vmatmul.mubr.bf16.gmra.mrb[0].mxu0 %v602
        %v850 = vpop.f32.mrb[0].mxu0
        %v851 = vadd.f32 0.0, %v850
        %v852 = vpop.f32.mrb[0].mxu0
        %v853 = vpop.f32.mrb[0].mxu0
        %v854 = vadd.f32 0.0, %v853
        %v855 = vpop.f32.mrb[0].mxu0
        %856 = vmatprep.mubr.bf16.mxu0 %v605
        %857 = vmatmul.mubr.bf16.gmra.mrb[0].mxu0 %v604
        %v858 = vpop.f32.mrb[0].mxu0
        %v859 = vadd.f32 0.0, %v858
        %v860 = vpop.f32.mrb[0].mxu0
        %v861 = vpop.f32.mrb[0].mxu0
        %v862 = vadd.f32 0.0, %v861
        %v863 = vpop.f32.mrb[0].mxu0
        %864 = vmatprep.mubr.bf16.mxu0 %v607
        %865 = vmatmul.mubr.bf16.gmra.mrb[0].mxu0 %v606
        %v866 = vpop.f32.mrb[0].mxu0
        %v867 = vadd.f32 0.0, %v866
        %v868 = vpop.f32.mrb[0].mxu0
        %v869 = vpop.f32.mrb[0].mxu0
        %v870 = vadd.f32 0.0, %v869
        %v871 = vpop.f32.mrb[0].mxu0
        %872 = vmatprep.mubr.bf16.mxu0 %v609
        %873 = vmatmul.mubr.bf16.gmra.mrb[0].mxu0 %v608
        %v874 = vpop.f32.mrb[0].mxu0
        %v875 = vadd.f32 0.0, %v874
        %v876 = vpop.f32.mrb[0].mxu0
        %v877 = vpop.f32.mrb[0].mxu0
        %v878 = vadd.f32 0.0, %v877
        %v879 = vpop.f32.mrb[0].mxu0
        %880 = vmatprep.mubr.bf16.mxu0 %v611
        %881 = vmatmul.mubr.bf16.gmra.mrb[0].mxu0 %v610
        %v882 = vpop.f32.mrb[0].mxu0
        %v883 = vadd.f32 0.0, %v882
        %v884 = vpop.f32.mrb[0].mxu0
        %v885 = vpop.f32.mrb[0].mxu0
        %v886 = vadd.f32 0.0, %v885
        %v887 = vpop.f32.mrb[0].mxu0
        %888 = vmatprep.mubr.bf16.mxu0 %v613
        %889 = vmatmul.mubr.bf16.gmra.mrb[0].mxu0 %v612
        %v890 = vpop.f32.mrb[0].mxu0
        %v891 = vadd.f32 0.0, %v890
        %v892 = vpop.f32.mrb[0].mxu0
        %v893 = vpop.f32.mrb[0].mxu0
        %v894 = vadd.f32 0.0, %v893
        %v895 = vpop.f32.mrb[0].mxu0
        %896 = vmatprep.mubr.bf16.mxu0 %v615
        %897 = vmatmul.mubr.bf16.gmra.mrb[0].mxu0 %v614
        %v898 = vpop.f32.mrb[0].mxu0
        %v899 = vadd.f32 0.0, %v898
        %v900 = vpop.f32.mrb[0].mxu0
        %v901 = vpop.f32.mrb[0].mxu0
        %v902 = vadd.f32 0.0, %v901
        %v903 = vpop.f32.mrb[0].mxu0
        %904 = vdwg.mxu0
        %v905 = vadd.f32 %v388, %v779
        %v906 = vadd.f32 %v389, %v782
        %v907 = vadd.f32 %v390, %v787
        %v908 = vadd.f32 %v391, %v790
        %v909 = vadd.f32 %v392, %v795
        %v910 = vadd.f32 %v393, %v798
        %v911 = vadd.f32 %v394, %v803
        %v912 = vadd.f32 %v395, %v806
        %v913 = vadd.f32 %v396, %v811
        %v914 = vadd.f32 %v397, %v814
        %v915 = vadd.f32 %v398, %v819
        %v916 = vadd.f32 %v399, %v822
        %v917 = vadd.f32 %v400, %v827
        %v918 = vadd.f32 %v401, %v830
        %v919 = vadd.f32 %v402, %v835
        %v920 = vadd.f32 %v403, %v838
        %v921 = vadd.f32 %v404, %v843
        %v922 = vadd.f32 %v405, %v846
        %v923 = vadd.f32 %v406, %v851
        %v924 = vadd.f32 %v407, %v854
        %v925 = vadd.f32 %v408, %v859
        %v926 = vadd.f32 %v409, %v862
        %v927 = vadd.f32 %v410, %v867
        %v928 = vadd.f32 %v411, %v870
        %v929 = vadd.f32 %v412, %v875
        %v930 = vadd.f32 %v413, %v878
        %v931 = vadd.f32 %v414, %v883
        %v932 = vadd.f32 %v415, %v886
        %v933 = vadd.f32 %v416, %v891
        %v934 = vadd.f32 %v417, %v894
        %v935 = vadd.f32 %v418, %v899
        %v936 = vadd.f32 %v419, %v902
        %937 = vst [vmem:[%s348] sm:$0xff] %v905
        %938 = vst [vmem:[%s348 + $0x8] sm:$0xff] %v906
        %939 = vst [vmem:[%s348 + $0x10] sm:$0xff] %v907
        %940 = vst [vmem:[%s348 + $0x18] sm:$0xff] %v908
        %941 = vst [vmem:[%s348 + $0x20] sm:$0xff] %v909
        %942 = vst [vmem:[%s348 + $0x28] sm:$0xff] %v910
        %943 = vst [vmem:[%s348 + $0x30] sm:$0xff] %v911
        %944 = vst [vmem:[%s348 + $0x38] sm:$0xff] %v912
        %945 = vst [vmem:[%s348 + $0x40] sm:$0xff] %v913
        %946 = vst [vmem:[%s348 + $0x48] sm:$0xff] %v914
        %947 = vst [vmem:[%s348 + $0x50] sm:$0xff] %v915
        %948 = vst [vmem:[%s348 + $0x58] sm:$0xff] %v916
        %949 = vst [vmem:[%s348 + $0x60] sm:$0xff] %v917
        %950 = vst [vmem:[%s348 + $0x68] sm:$0xff] %v918
        %951 = vst [vmem:[%s348 + $0x70] sm:$0xff] %v919
        %952 = vst [vmem:[%s348 + $0x78] sm:$0xff] %v920
        %953 = vst [vmem:[%s348 + $0x80] sm:$0xff] %v921
        %954 = vst [vmem:[%s348 + $0x88] sm:$0xff] %v922
        %955 = vst [vmem:[%s348 + $0x90] sm:$0xff] %v923
        %956 = vst [vmem:[%s348 + $0x98] sm:$0xff] %v924
        %957 = vst [vmem:[%s348 + $0xa0] sm:$0xff] %v925
        %958 = vst [vmem:[%s348 + $0xa8] sm:$0xff] %v926
        %959 = vst [vmem:[%s348 + $0xb0] sm:$0xff] %v927
        %960 = vst [vmem:[%s348 + $0xb8] sm:$0xff] %v928
        %961 = vst [vmem:[%s348 + $0xc0] sm:$0xff] %v929
        %962 = vst [vmem:[%s348 + $0xc8] sm:$0xff] %v930
        %963 = vst [vmem:[%s348 + $0xd0] sm:$0xff] %v931
        %964 = vst [vmem:[%s348 + $0xd8] sm:$0xff] %v932
        %965 = vst [vmem:[%s348 + $0xe0] sm:$0xff] %v933
        %966 = vst [vmem:[%s348 + $0xe8] sm:$0xff] %v934
        %967 = vst [vmem:[%s348 + $0xf0] sm:$0xff] %v935
        %968 = vst [vmem:[%s348 + $0xf8] sm:$0xff] %v936
        %p969 = scmp.eq.s32.totalorder %s19, 2
        // Predicated region
        $region75: #{gcn_forward.3} parent=65 // pred_check
          %p970 = pneg %p969
        $region76: #{gcn_forward.3} parent=65 // pred_check_branch
          %972 = sbr.rel (%p970) target = $region78
        $region77: #{gcn_forward.3} parent=65 // pred_region
          %v973 = vld [vmem:[%s348] sm:$0xff]
          %v974 = vld [vmem:[%s348 + $0x8] sm:$0xff]
          %v975 = vld [vmem:[%s348 + $0x10] sm:$0xff]
          %v976 = vld [vmem:[%s348 + $0x18] sm:$0xff]
          %v977 = vld [vmem:[%s348 + $0x20] sm:$0xff]
          %v978 = vld [vmem:[%s348 + $0x28] sm:$0xff]
          %v979 = vld [vmem:[%s348 + $0x30] sm:$0xff]
          %v980 = vld [vmem:[%s348 + $0x38] sm:$0xff]
          %v981 = vld [vmem:[%s348 + $0x40] sm:$0xff]
          %v982 = vld [vmem:[%s348 + $0x48] sm:$0xff]
          %v983 = vld [vmem:[%s348 + $0x50] sm:$0xff]
          %v984 = vld [vmem:[%s348 + $0x58] sm:$0xff]
          %v985 = vld [vmem:[%s348 + $0x60] sm:$0xff]
          %v986 = vld [vmem:[%s348 + $0x68] sm:$0xff]
          %v987 = vld [vmem:[%s348 + $0x70] sm:$0xff]
          %v988 = vld [vmem:[%s348 + $0x78] sm:$0xff]
          %v989 = vld [vmem:[%s348 + $0x80] sm:$0xff]
          %v990 = vld [vmem:[%s348 + $0x88] sm:$0xff]
          %v991 = vld [vmem:[%s348 + $0x90] sm:$0xff]
          %v992 = vld [vmem:[%s348 + $0x98] sm:$0xff]
          %v993 = vld [vmem:[%s348 + $0xa0] sm:$0xff]
          %v994 = vld [vmem:[%s348 + $0xa8] sm:$0xff]
          %v995 = vld [vmem:[%s348 + $0xb0] sm:$0xff]
          %v996 = vld [vmem:[%s348 + $0xb8] sm:$0xff]
          %v997 = vld [vmem:[%s348 + $0xc0] sm:$0xff]
          %v998 = vld [vmem:[%s348 + $0xc8] sm:$0xff]
          %v999 = vld [vmem:[%s348 + $0xd0] sm:$0xff]
          %v1000 = vld [vmem:[%s348 + $0xd8] sm:$0xff]
          %v1001 = vld [vmem:[%s348 + $0xe0] sm:$0xff]
          %v1002 = vld [vmem:[%s348 + $0xe8] sm:$0xff]
          %v1003 = vld [vmem:[%s348 + $0xf0] sm:$0xff]
          %v1004 = vld [vmem:[%s348 + $0xf8] sm:$0xff]
          %v1005 = vld [vmem:[%s2] sm:$0x1]
          %v1007 = vlaneseq
          %v1008 = vshrl.u32 %v1007, 7
          %v1009 = vsub.s32 0, %v1008
          %v1010 = vrot.slane %v1005, %v1009
          %v1012 = vadd.f32 %v973, %v1010
          %v1013 = vadd.f32 %v974, %v1010
          %v1014 = vadd.f32 %v975, %v1010
          %v1015 = vadd.f32 %v976, %v1010
          %v1016 = vadd.f32 %v977, %v1010
          %v1017 = vadd.f32 %v978, %v1010
          %v1018 = vadd.f32 %v979, %v1010
          %v1019 = vadd.f32 %v980, %v1010
          %v1020 = vadd.f32 %v981, %v1010
          %v1021 = vadd.f32 %v982, %v1010
          %v1022 = vadd.f32 %v983, %v1010
          %v1023 = vadd.f32 %v984, %v1010
          %v1024 = vadd.f32 %v985, %v1010
          %v1025 = vadd.f32 %v986, %v1010
          %v1026 = vadd.f32 %v987, %v1010
          %v1027 = vadd.f32 %v988, %v1010
          %v1028 = vadd.f32 %v989, %v1010
          %v1029 = vadd.f32 %v990, %v1010
          %v1030 = vadd.f32 %v991, %v1010
          %v1031 = vadd.f32 %v992, %v1010
          %v1032 = vadd.f32 %v993, %v1010
          %v1033 = vadd.f32 %v994, %v1010
          %v1034 = vadd.f32 %v995, %v1010
          %v1035 = vadd.f32 %v996, %v1010
          %v1036 = vadd.f32 %v997, %v1010
          %v1037 = vadd.f32 %v998, %v1010
          %v1038 = vadd.f32 %v999, %v1010
          %v1039 = vadd.f32 %v1000, %v1010
          %v1040 = vadd.f32 %v1001, %v1010
          %v1041 = vadd.f32 %v1002, %v1010
          %v1042 = vadd.f32 %v1003, %v1010
          %v1043 = vadd.f32 %v1004, %v1010
          %v1044 = vlaneseq
          %v1045 = vand.u32 %v1044, 127
          %vm1046 = vcmp.lt.s32.totalorder %v1045, 7
          %v1047 = vsel %vm1046, %v1012, -inf
          %v1048 = vsel %vm1046, %v1013, -inf
          %v1049 = vsel %vm1046, %v1014, -inf
          %v1050 = vsel %vm1046, %v1015, -inf
          %v1051 = vsel %vm1046, %v1016, -inf
          %v1052 = vsel %vm1046, %v1017, -inf
          %v1053 = vsel %vm1046, %v1018, -inf
          %v1054 = vsel %vm1046, %v1019, -inf
          %v1055 = vsel %vm1046, %v1020, -inf
          %v1056 = vsel %vm1046, %v1021, -inf
          %v1057 = vsel %vm1046, %v1022, -inf
          %v1058 = vsel %vm1046, %v1023, -inf
          %v1059 = vsel %vm1046, %v1024, -inf
          %v1060 = vsel %vm1046, %v1025, -inf
          %v1061 = vsel %vm1046, %v1026, -inf
          %v1062 = vsel %vm1046, %v1027, -inf
          %v1063 = vsel %vm1046, %v1028, -inf
          %v1064 = vsel %vm1046, %v1029, -inf
          %v1065 = vsel %vm1046, %v1030, -inf
          %v1066 = vsel %vm1046, %v1031, -inf
          %v1067 = vsel %vm1046, %v1032, -inf
          %v1068 = vsel %vm1046, %v1033, -inf
          %v1069 = vsel %vm1046, %v1034, -inf
          %v1070 = vsel %vm1046, %v1035, -inf
          %v1071 = vsel %vm1046, %v1036, -inf
          %v1072 = vsel %vm1046, %v1037, -inf
          %v1073 = vsel %vm1046, %v1038, -inf
          %v1074 = vsel %vm1046, %v1039, -inf
          %v1075 = vsel %vm1046, %v1040, -inf
          %v1076 = vsel %vm1046, %v1041, -inf
          %v1077 = vsel %vm1046, %v1042, -inf
          %v1078 = vsel %vm1046, %v1043, -inf
          %1079 = vmax.xlane.f32.xlu0 %v1047
          %v1080 = vpop.xlane.xlu0 %1079
          %1081 = vmax.xlane.f32.xlu0 %v1048
          %v1082 = vpop.xlane.xlu0 %1081
          %1083 = vmax.xlane.f32.xlu0 %v1049
          %v1084 = vpop.xlane.xlu0 %1083
          %1085 = vmax.xlane.f32.xlu0 %v1050
          %v1086 = vpop.xlane.xlu0 %1085
          %1087 = vmax.xlane.f32.xlu0 %v1051
          %v1088 = vpop.xlane.xlu0 %1087
          %1089 = vmax.xlane.f32.xlu0 %v1052
          %v1090 = vpop.xlane.xlu0 %1089
          %1091 = vmax.xlane.f32.xlu0 %v1053
          %v1092 = vpop.xlane.xlu0 %1091
          %1093 = vmax.xlane.f32.xlu0 %v1054
          %v1094 = vpop.xlane.xlu0 %1093
          %1095 = vmax.xlane.f32.xlu0 %v1055
          %v1096 = vpop.xlane.xlu0 %1095
          %1097 = vmax.xlane.f32.xlu0 %v1056
          %v1098 = vpop.xlane.xlu0 %1097
          %1099 = vmax.xlane.f32.xlu0 %v1057
          %v1100 = vpop.xlane.xlu0 %1099
          %1101 = vmax.xlane.f32.xlu0 %v1058
          %v1102 = vpop.xlane.xlu0 %1101
          %1103 = vmax.xlane.f32.xlu0 %v1059
          %v1104 = vpop.xlane.xlu0 %1103
          %1105 = vmax.xlane.f32.xlu0 %v1060
          %v1106 = vpop.xlane.xlu0 %1105
          %1107 = vmax.xlane.f32.xlu0 %v1061
          %v1108 = vpop.xlane.xlu0 %1107
          %1109 = vmax.xlane.f32.xlu0 %v1062
          %v1110 = vpop.xlane.xlu0 %1109
          %1111 = vmax.xlane.f32.xlu0 %v1063
          %v1112 = vpop.xlane.xlu0 %1111
          %1113 = vmax.xlane.f32.xlu0 %v1064
          %v1114 = vpop.xlane.xlu0 %1113
          %1115 = vmax.xlane.f32.xlu0 %v1065
          %v1116 = vpop.xlane.xlu0 %1115
          %1117 = vmax.xlane.f32.xlu0 %v1066
          %v1118 = vpop.xlane.xlu0 %1117
          %1119 = vmax.xlane.f32.xlu0 %v1067
          %v1120 = vpop.xlane.xlu0 %1119
          %1121 = vmax.xlane.f32.xlu0 %v1068
          %v1122 = vpop.xlane.xlu0 %1121
          %1123 = vmax.xlane.f32.xlu0 %v1069
          %v1124 = vpop.xlane.xlu0 %1123
          %1125 = vmax.xlane.f32.xlu0 %v1070
          %v1126 = vpop.xlane.xlu0 %1125
          %1127 = vmax.xlane.f32.xlu0 %v1071
          %v1128 = vpop.xlane.xlu0 %1127
          %1129 = vmax.xlane.f32.xlu0 %v1072
          %v1130 = vpop.xlane.xlu0 %1129
          %1131 = vmax.xlane.f32.xlu0 %v1073
          %v1132 = vpop.xlane.xlu0 %1131
          %1133 = vmax.xlane.f32.xlu0 %v1074
          %v1134 = vpop.xlane.xlu0 %1133
          %1135 = vmax.xlane.f32.xlu0 %v1075
          %v1136 = vpop.xlane.xlu0 %1135
          %1137 = vmax.xlane.f32.xlu0 %v1076
          %v1138 = vpop.xlane.xlu0 %1137
          %1139 = vmax.xlane.f32.xlu0 %v1077
          %v1140 = vpop.xlane.xlu0 %1139
          %1141 = vmax.xlane.f32.xlu0 %v1078
          %v1142 = vpop.xlane.xlu0 %1141
          %v1143 = vsub.f32 %v1047, %v1080
          %v1144 = vsub.f32 %v1048, %v1082
          %v1145 = vsub.f32 %v1049, %v1084
          %v1146 = vsub.f32 %v1050, %v1086
          %v1147 = vsub.f32 %v1051, %v1088
          %v1148 = vsub.f32 %v1052, %v1090
          %v1149 = vsub.f32 %v1053, %v1092
          %v1150 = vsub.f32 %v1054, %v1094
          %v1151 = vsub.f32 %v1055, %v1096
          %v1152 = vsub.f32 %v1056, %v1098
          %v1153 = vsub.f32 %v1057, %v1100
          %v1154 = vsub.f32 %v1058, %v1102
          %v1155 = vsub.f32 %v1059, %v1104
          %v1156 = vsub.f32 %v1060, %v1106
          %v1157 = vsub.f32 %v1061, %v1108
          %v1158 = vsub.f32 %v1062, %v1110
          %v1159 = vsub.f32 %v1063, %v1112
          %v1160 = vsub.f32 %v1064, %v1114
          %v1161 = vsub.f32 %v1065, %v1116
          %v1162 = vsub.f32 %v1066, %v1118
          %v1163 = vsub.f32 %v1067, %v1120
          %v1164 = vsub.f32 %v1068, %v1122
          %v1165 = vsub.f32 %v1069, %v1124
          %v1166 = vsub.f32 %v1070, %v1126
          %v1167 = vsub.f32 %v1071, %v1128
          %v1168 = vsub.f32 %v1072, %v1130
          %v1169 = vsub.f32 %v1073, %v1132
          %v1170 = vsub.f32 %v1074, %v1134
          %v1171 = vsub.f32 %v1075, %v1136
          %v1172 = vsub.f32 %v1076, %v1138
          %v1173 = vsub.f32 %v1077, %v1140
          %v1174 = vsub.f32 %v1078, %v1142
          %v1175 = vmul.f32 %v1143, 1.442695
          %v1176 = vpow.pop %v1175
          %v1177 = vmul.f32 %v1144, 1.442695
          %v1178 = vpow.pop %v1177
          %v1179 = vmul.f32 %v1145, 1.442695
          %v1180 = vpow.pop %v1179
          %v1181 = vmul.f32 %v1146, 1.442695
          %v1182 = vpow.pop %v1181
          %v1183 = vmul.f32 %v1147, 1.442695
          %v1184 = vpow.pop %v1183
          %v1185 = vmul.f32 %v1148, 1.442695
          %v1186 = vpow.pop %v1185
          %v1187 = vmul.f32 %v1149, 1.442695
          %v1188 = vpow.pop %v1187
          %v1189 = vmul.f32 %v1150, 1.442695
          %v1190 = vpow.pop %v1189
          %v1191 = vmul.f32 %v1151, 1.442695
          %v1192 = vpow.pop %v1191
          %v1193 = vmul.f32 %v1152, 1.442695
          %v1194 = vpow.pop %v1193
          %v1195 = vmul.f32 %v1153, 1.442695
          %v1196 = vpow.pop %v1195
          %v1197 = vmul.f32 %v1154, 1.442695
          %v1198 = vpow.pop %v1197
          %v1199 = vmul.f32 %v1155, 1.442695
          %v1200 = vpow.pop %v1199
          %v1201 = vmul.f32 %v1156, 1.442695
          %v1202 = vpow.pop %v1201
          %v1203 = vmul.f32 %v1157, 1.442695
          %v1204 = vpow.pop %v1203
          %v1205 = vmul.f32 %v1158, 1.442695
          %v1206 = vpow.pop %v1205
          %v1207 = vmul.f32 %v1159, 1.442695
          %v1208 = vpow.pop %v1207
          %v1209 = vmul.f32 %v1160, 1.442695
          %v1210 = vpow.pop %v1209
          %v1211 = vmul.f32 %v1161, 1.442695
          %v1212 = vpow.pop %v1211
          %v1213 = vmul.f32 %v1162, 1.442695
          %v1214 = vpow.pop %v1213
          %v1215 = vmul.f32 %v1163, 1.442695
          %v1216 = vpow.pop %v1215
          %v1217 = vmul.f32 %v1164, 1.442695
          %v1218 = vpow.pop %v1217
          %v1219 = vmul.f32 %v1165, 1.442695
          %v1220 = vpow.pop %v1219
          %v1221 = vmul.f32 %v1166, 1.442695
          %v1222 = vpow.pop %v1221
          %v1223 = vmul.f32 %v1167, 1.442695
          %v1224 = vpow.pop %v1223
          %v1225 = vmul.f32 %v1168, 1.442695
          %v1226 = vpow.pop %v1225
          %v1227 = vmul.f32 %v1169, 1.442695
          %v1228 = vpow.pop %v1227
          %v1229 = vmul.f32 %v1170, 1.442695
          %v1230 = vpow.pop %v1229
          %v1231 = vmul.f32 %v1171, 1.442695
          %v1232 = vpow.pop %v1231
          %v1233 = vmul.f32 %v1172, 1.442695
          %v1234 = vpow.pop %v1233
          %v1235 = vmul.f32 %v1173, 1.442695
          %v1236 = vpow.pop %v1235
          %v1237 = vmul.f32 %v1174, 1.442695
          %v1238 = vpow.pop %v1237
          %1239 = vadd.xlane.f32.xlu0 %v1176
          %v1240 = vpop.xlane.xlu0 %1239
          %1241 = vadd.xlane.f32.xlu0 %v1178
          %v1242 = vpop.xlane.xlu0 %1241
          %1243 = vadd.xlane.f32.xlu0 %v1180
          %v1244 = vpop.xlane.xlu0 %1243
          %1245 = vadd.xlane.f32.xlu0 %v1182
          %v1246 = vpop.xlane.xlu0 %1245
          %1247 = vadd.xlane.f32.xlu0 %v1184
          %v1248 = vpop.xlane.xlu0 %1247
          %1249 = vadd.xlane.f32.xlu0 %v1186
          %v1250 = vpop.xlane.xlu0 %1249
          %1251 = vadd.xlane.f32.xlu0 %v1188
          %v1252 = vpop.xlane.xlu0 %1251
          %1253 = vadd.xlane.f32.xlu0 %v1190
          %v1254 = vpop.xlane.xlu0 %1253
          %1255 = vadd.xlane.f32.xlu0 %v1192
          %v1256 = vpop.xlane.xlu0 %1255
          %1257 = vadd.xlane.f32.xlu0 %v1194
          %v1258 = vpop.xlane.xlu0 %1257
          %1259 = vadd.xlane.f32.xlu0 %v1196
          %v1260 = vpop.xlane.xlu0 %1259
          %1261 = vadd.xlane.f32.xlu0 %v1198
          %v1262 = vpop.xlane.xlu0 %1261
          %1263 = vadd.xlane.f32.xlu0 %v1200
          %v1264 = vpop.xlane.xlu0 %1263
          %1265 = vadd.xlane.f32.xlu0 %v1202
          %v1266 = vpop.xlane.xlu0 %1265
          %1267 = vadd.xlane.f32.xlu0 %v1204
          %v1268 = vpop.xlane.xlu0 %1267
          %1269 = vadd.xlane.f32.xlu0 %v1206
          %v1270 = vpop.xlane.xlu0 %1269
          %1271 = vadd.xlane.f32.xlu0 %v1208
          %v1272 = vpop.xlane.xlu0 %1271
          %1273 = vadd.xlane.f32.xlu0 %v1210
          %v1274 = vpop.xlane.xlu0 %1273
          %1275 = vadd.xlane.f32.xlu0 %v1212
          %v1276 = vpop.xlane.xlu0 %1275
          %1277 = vadd.xlane.f32.xlu0 %v1214
          %v1278 = vpop.xlane.xlu0 %1277
          %1279 = vadd.xlane.f32.xlu0 %v1216
          %v1280 = vpop.xlane.xlu0 %1279
          %1281 = vadd.xlane.f32.xlu0 %v1218
          %v1282 = vpop.xlane.xlu0 %1281
          %1283 = vadd.xlane.f32.xlu0 %v1220
          %v1284 = vpop.xlane.xlu0 %1283
          %1285 = vadd.xlane.f32.xlu0 %v1222
          %v1286 = vpop.xlane.xlu0 %1285
          %1287 = vadd.xlane.f32.xlu0 %v1224
          %v1288 = vpop.xlane.xlu0 %1287
          %1289 = vadd.xlane.f32.xlu0 %v1226
          %v1290 = vpop.xlane.xlu0 %1289
          %1291 = vadd.xlane.f32.xlu0 %v1228
          %v1292 = vpop.xlane.xlu0 %1291
          %1293 = vadd.xlane.f32.xlu0 %v1230
          %v1294 = vpop.xlane.xlu0 %1293
          %1295 = vadd.xlane.f32.xlu0 %v1232
          %v1296 = vpop.xlane.xlu0 %1295
          %1297 = vadd.xlane.f32.xlu0 %v1234
          %v1298 = vpop.xlane.xlu0 %1297
          %1299 = vadd.xlane.f32.xlu0 %v1236
          %v1300 = vpop.xlane.xlu0 %1299
          %1301 = vadd.xlane.f32.xlu0 %v1238
          %v1302 = vpop.xlane.xlu0 %1301
          %v1303 = vlog2.pop %v1240
          %v1304 = vmul.f32 %v1303, 0.6931472
          %v1305 = vlog2.pop %v1242
          %v1306 = vmul.f32 %v1305, 0.6931472
          %v1307 = vlog2.pop %v1244
          %v1308 = vmul.f32 %v1307, 0.6931472
          %v1309 = vlog2.pop %v1246
          %v1310 = vmul.f32 %v1309, 0.6931472
          %v1311 = vlog2.pop %v1248
          %v1312 = vmul.f32 %v1311, 0.6931472
          %v1313 = vlog2.pop %v1250
          %v1314 = vmul.f32 %v1313, 0.6931472
          %v1315 = vlog2.pop %v1252
          %v1316 = vmul.f32 %v1315, 0.6931472
          %v1317 = vlog2.pop %v1254
          %v1318 = vmul.f32 %v1317, 0.6931472
          %v1319 = vlog2.pop %v1256
          %v1320 = vmul.f32 %v1319, 0.6931472
          %v1321 = vlog2.pop %v1258
          %v1322 = vmul.f32 %v1321, 0.6931472
          %v1323 = vlog2.pop %v1260
          %v1324 = vmul.f32 %v1323, 0.6931472
          %v1325 = vlog2.pop %v1262
          %v1326 = vmul.f32 %v1325, 0.6931472
          %v1327 = vlog2.pop %v1264
          %v1328 = vmul.f32 %v1327, 0.6931472
          %v1329 = vlog2.pop %v1266
          %v1330 = vmul.f32 %v1329, 0.6931472
          %v1331 = vlog2.pop %v1268
          %v1332 = vmul.f32 %v1331, 0.6931472
          %v1333 = vlog2.pop %v1270
          %v1334 = vmul.f32 %v1333, 0.6931472
          %v1335 = vlog2.pop %v1272
          %v1336 = vmul.f32 %v1335, 0.6931472
          %v1337 = vlog2.pop %v1274
          %v1338 = vmul.f32 %v1337, 0.6931472
          %v1339 = vlog2.pop %v1276
          %v1340 = vmul.f32 %v1339, 0.6931472
          %v1341 = vlog2.pop %v1278
          %v1342 = vmul.f32 %v1341, 0.6931472
          %v1343 = vlog2.pop %v1280
          %v1344 = vmul.f32 %v1343, 0.6931472
          %v1345 = vlog2.pop %v1282
          %v1346 = vmul.f32 %v1345, 0.6931472
          %v1347 = vlog2.pop %v1284
          %v1348 = vmul.f32 %v1347, 0.6931472
          %v1349 = vlog2.pop %v1286
          %v1350 = vmul.f32 %v1349, 0.6931472
          %v1351 = vlog2.pop %v1288
          %v1352 = vmul.f32 %v1351, 0.6931472
          %v1353 = vlog2.pop %v1290
          %v1354 = vmul.f32 %v1353, 0.6931472
          %v1355 = vlog2.pop %v1292
          %v1356 = vmul.f32 %v1355, 0.6931472
          %v1357 = vlog2.pop %v1294
          %v1358 = vmul.f32 %v1357, 0.6931472
          %v1359 = vlog2.pop %v1296
          %v1360 = vmul.f32 %v1359, 0.6931472
          %v1361 = vlog2.pop %v1298
          %v1362 = vmul.f32 %v1361, 0.6931472
          %v1363 = vlog2.pop %v1300
          %v1364 = vmul.f32 %v1363, 0.6931472
          %v1365 = vlog2.pop %v1302
          %v1366 = vmul.f32 %v1365, 0.6931472
          %v1367 = vsub.f32 %v1143, %v1304
          %v1368 = vsub.f32 %v1144, %v1306
          %v1369 = vsub.f32 %v1145, %v1308
          %v1370 = vsub.f32 %v1146, %v1310
          %v1371 = vsub.f32 %v1147, %v1312
          %v1372 = vsub.f32 %v1148, %v1314
          %v1373 = vsub.f32 %v1149, %v1316
          %v1374 = vsub.f32 %v1150, %v1318
          %v1375 = vsub.f32 %v1151, %v1320
          %v1376 = vsub.f32 %v1152, %v1322
          %v1377 = vsub.f32 %v1153, %v1324
          %v1378 = vsub.f32 %v1154, %v1326
          %v1379 = vsub.f32 %v1155, %v1328
          %v1380 = vsub.f32 %v1156, %v1330
          %v1381 = vsub.f32 %v1157, %v1332
          %v1382 = vsub.f32 %v1158, %v1334
          %v1383 = vsub.f32 %v1159, %v1336
          %v1384 = vsub.f32 %v1160, %v1338
          %v1385 = vsub.f32 %v1161, %v1340
          %v1386 = vsub.f32 %v1162, %v1342
          %v1387 = vsub.f32 %v1163, %v1344
          %v1388 = vsub.f32 %v1164, %v1346
          %v1389 = vsub.f32 %v1165, %v1348
          %v1390 = vsub.f32 %v1166, %v1350
          %v1391 = vsub.f32 %v1167, %v1352
          %v1392 = vsub.f32 %v1168, %v1354
          %v1393 = vsub.f32 %v1169, %v1356
          %v1394 = vsub.f32 %v1170, %v1358
          %v1395 = vsub.f32 %v1171, %v1360
          %v1396 = vsub.f32 %v1172, %v1362
          %v1397 = vsub.f32 %v1173, %v1364
          %v1398 = vsub.f32 %v1174, %v1366
          %v1399 = vsel %vm1046, %v1367, 0.0
          %v1400 = vsel %vm1046, %v1368, 0.0
          %v1401 = vsel %vm1046, %v1369, 0.0
          %v1402 = vsel %vm1046, %v1370, 0.0
          %v1403 = vsel %vm1046, %v1371, 0.0
          %v1404 = vsel %vm1046, %v1372, 0.0
          %v1405 = vsel %vm1046, %v1373, 0.0
          %v1406 = vsel %vm1046, %v1374, 0.0
          %v1407 = vsel %vm1046, %v1375, 0.0
          %v1408 = vsel %vm1046, %v1376, 0.0
          %v1409 = vsel %vm1046, %v1377, 0.0
          %v1410 = vsel %vm1046, %v1378, 0.0
          %v1411 = vsel %vm1046, %v1379, 0.0
          %v1412 = vsel %vm1046, %v1380, 0.0
          %v1413 = vsel %vm1046, %v1381, 0.0
          %v1414 = vsel %vm1046, %v1382, 0.0
          %v1415 = vsel %vm1046, %v1383, 0.0
          %v1416 = vsel %vm1046, %v1384, 0.0
          %v1417 = vsel %vm1046, %v1385, 0.0
          %v1418 = vsel %vm1046, %v1386, 0.0
          %v1419 = vsel %vm1046, %v1387, 0.0
          %v1420 = vsel %vm1046, %v1388, 0.0
          %v1421 = vsel %vm1046, %v1389, 0.0
          %v1422 = vsel %vm1046, %v1390, 0.0
          %v1423 = vsel %vm1046, %v1391, 0.0
          %v1424 = vsel %vm1046, %v1392, 0.0
          %v1425 = vsel %vm1046, %v1393, 0.0
          %v1426 = vsel %vm1046, %v1394, 0.0
          %v1427 = vsel %vm1046, %v1395, 0.0
          %v1428 = vsel %vm1046, %v1396, 0.0
          %v1429 = vsel %vm1046, %v1397, 0.0
          %v1430 = vsel %vm1046, %v1398, 0.0
          %1431 = vst [vmem:[%s348] sm:$0xff] %v1399
          %1432 = vst [vmem:[%s348 + $0x8] sm:$0xff] %v1400
          %1433 = vst [vmem:[%s348 + $0x10] sm:$0xff] %v1401
          %1434 = vst [vmem:[%s348 + $0x18] sm:$0xff] %v1402
          %1435 = vst [vmem:[%s348 + $0x20] sm:$0xff] %v1403
          %1436 = vst [vmem:[%s348 + $0x28] sm:$0xff] %v1404
          %1437 = vst [vmem:[%s348 + $0x30] sm:$0xff] %v1405
          %1438 = vst [vmem:[%s348 + $0x38] sm:$0xff] %v1406
          %1439 = vst [vmem:[%s348 + $0x40] sm:$0xff] %v1407
          %1440 = vst [vmem:[%s348 + $0x48] sm:$0xff] %v1408
          %1441 = vst [vmem:[%s348 + $0x50] sm:$0xff] %v1409
          %1442 = vst [vmem:[%s348 + $0x58] sm:$0xff] %v1410
          %1443 = vst [vmem:[%s348 + $0x60] sm:$0xff] %v1411
          %1444 = vst [vmem:[%s348 + $0x68] sm:$0xff] %v1412
          %1445 = vst [vmem:[%s348 + $0x70] sm:$0xff] %v1413
          %1446 = vst [vmem:[%s348 + $0x78] sm:$0xff] %v1414
          %1447 = vst [vmem:[%s348 + $0x80] sm:$0xff] %v1415
          %1448 = vst [vmem:[%s348 + $0x88] sm:$0xff] %v1416
          %1449 = vst [vmem:[%s348 + $0x90] sm:$0xff] %v1417
          %1450 = vst [vmem:[%s348 + $0x98] sm:$0xff] %v1418
          %1451 = vst [vmem:[%s348 + $0xa0] sm:$0xff] %v1419
          %1452 = vst [vmem:[%s348 + $0xa8] sm:$0xff] %v1420
          %1453 = vst [vmem:[%s348 + $0xb0] sm:$0xff] %v1421
          %1454 = vst [vmem:[%s348 + $0xb8] sm:$0xff] %v1422
          %1455 = vst [vmem:[%s348 + $0xc0] sm:$0xff] %v1423
          %1456 = vst [vmem:[%s348 + $0xc8] sm:$0xff] %v1424
          %1457 = vst [vmem:[%s348 + $0xd0] sm:$0xff] %v1425
          %1458 = vst [vmem:[%s348 + $0xd8] sm:$0xff] %v1426
          %1459 = vst [vmem:[%s348 + $0xe0] sm:$0xff] %v1427
          %1460 = vst [vmem:[%s348 + $0xe8] sm:$0xff] %v1428
          %1461 = vst [vmem:[%s348 + $0xf0] sm:$0xff] %v1429
          %1462 = vst [vmem:[%s348 + $0xf8] sm:$0xff] %v1430
        $region78: #{gcn_forward.3} parent=65 // pred_fallthru
          _
        %s1463 = smul.u32 32, %s18
        %p1464 = scmp.lt.s32.totalorder %s1463, 95
        %s1465 = scalar_select %p1464, %s1463, 95
        %s1466 = smul.addr %s1465, 8
        %s1467 = scalar_lea.vmem %s3, %s1466
        // Predicated region
        $region79: #{gcn_forward.3} parent=65 // pred_check
          %p1468 = pneg %p114
        $region80: #{gcn_forward.3} parent=65 // pred_check_branch
          %1470 = sbr.rel (%p1468) target = $region82
        $region81: #{gcn_forward.3} parent=65 // pred_region
          %s1471 = smul.u32 32, %s18
        $region82: #{gcn_forward.3} parent=65 // pred_fallthru
          _
      $region66: #{gcn_forward.3} parent=5 // pred_fallthru
        _
      %p1472 = scmp.le.s32.totalorder 2, %s9
      // Predicated region
      $region83: #{gcn_forward.3} parent=5 // pred_check
        %p1473 = pneg %p1472
      $region84: #{gcn_forward.3} parent=5 // pred_check_branch
        %1475 = sbr.rel (%p1473) target = $region86
      $region85: #{gcn_forward.3} parent=5 // pred_region
        %s1476 = ssub.s32 %s9, 2
        // Predicated region
        $region87: #{gcn_forward.3} parent=85 // pred_check
          %p1477 = pneg %p120
        $region88: #{gcn_forward.3} parent=85 // pred_check_branch
          %1479 = sbr.rel (%p1477) target = $region90
        $region89: #{gcn_forward.3} parent=85 // pred_region
          %s1480 = smul.u32 32, %s20
          %p1481 = scmp.lt.s32.totalorder %s1480, 95
          %s1482 = scalar_select %p1481, %s1480, 95
          %s1483 = smul.addr %s1482, 8
          %s1484 = scalar_lea.vmem %s3, %s1483
        $region90: #{gcn_forward.3} parent=85 // pred_fallthru
          _
      $region86: #{gcn_forward.3} parent=5 // pred_fallthru
        _
    $region6: #{gcn_forward.3} parent=1 // loop_footer
      %s13 = sadd.s32 1, %s9
    $region7: #{gcn_forward.3} parent=1 // loop_footer_branch
      %8 = sbr.rel target = $region3
    $region8: #{gcn_forward.3} parent=1 // loop_exit
      _

// kernel: gcn_forward.2
$region0: #{gcn_forward.2}
  #allocation0 [shape = 'u32[]', space=smem, size = 0x4, offset = 0x4, fixed_abs, tag = 'smem constant byte address 0x4 - core index']
  #allocation1 [shape = 'u32[144,128]{1,0:T(1,128)}', space=vmem, size = 0x12000, scoped, tag = 'internal scratch']
  #allocation2 [shape = 'f32[256,128]{1,0:T(8,128)}', space=vmem, size = 0x20000, scoped, tag = 'scratch operand']
  %s0 = inlined_call_operand.hbm [shape: bf16[768,768], index: 0, kind: input, shape index: {}]
  %s1 = inlined_call_operand.vmem [shape: bf16[768,128], index: 1, kind: input, shape index: {}]
  %s2 = inlined_call_operand.vmem [shape: f32[1,128], index: 2, kind: input, shape index: {}]
  %s3 = inlined_call_operand.vmem [shape: bf16[128,128], index: 3, kind: input, shape index: {}]
  %s4 = inlined_call_operand.vmem [shape: bf16[768,128], index: 4, kind: output, shape index: {}]
  %s5 = sld [smem:[#allocation0]]
  $region61: #{gcn_forward.2} parent=0
    _
  %s7 = ssub.s32 1, %s5
  %s8 = scalar_select 0, %s7, %s5
  $region1: #{gcn_forward.2} parent=0
    #allocation3 [shape = 'u8[262144]{0}', space=vmem, size = 0x40000, scoped, tag = 'input window, operand 0']
    #allocation4 [shape = 's32[2]{0}', space=sflag, size = 0x8, scoped, tag = 'scoped memory for gcn_forward.2']
    %9 = vsyncpa [#allocation4], 0
    %s10 = scalar_lea.sflag [#allocation4], 1
    %11 = vsyncpa %s10, 0
    loop: start=0, step=1, limit=11
    $region2: #{gcn_forward.2} parent=1 // loop_pre_header
      _
    $region3: #{gcn_forward.2} parent=1 // loop_header
      %s13 = sphi 0, %s17
      %p14 = scmp.ge.s32.totalorder %s13, 11
      %s20 = sphi 0, %s32
      %s21 = sphi 0, %s28
      %s22 = sphi 0, %s20
      %s23 = sphi 0, %s21
      %s24 = sphi 0, %s22
      %s25 = sphi 0, %s23
      %s37 = sphi 0, %s39
      %s40 = sphi 0, %s37
      %s41 = sphi 0, %s40
      %s57 = sphi 0, %s41
      %s61 = sphi 0, %s61
      %s63 = sphi 0, %s61
      %s64 = sphi 0, %s63
      %s78 = sphi 0, %s64
      %s82 = sphi 0, %s82
      %s84 = sphi 0, %s82
      %s85 = sphi 0, %s84
      %s99 = sphi 0, %s85
      %s103 = sphi 0, %s103
      %s105 = sphi 0, %s103
      %s106 = sphi 0, %s105
      %s120 = sphi 0, %s106
      %s126 = sphi 0, %s128
      %s129 = sphi 0, %s126
      %s130 = sphi 0, %s129
      %s146 = sphi 0, %s130
    $region4: #{gcn_forward.2} parent=1 // loop_header_branch
      %16 = sbr.rel (%p14) target = $region8
    $region5: #{gcn_forward.2} parent=1 // loop_body
      %s18 = ssub.s32 %s13, 1
      %s19 = ssub.s32 %s13, 2
      %s26 = sadd.s32 1, %s21
      %p27 = scmp.ge.s32.totalorder %s26, 3
      %s28 = scalar_select %p27, 0, %s26
      %s29 = sadd.s32 1, %s20
      %s30 = scalar_select %p27, %s29, %s20
      %p31 = scmp.ge.s32.totalorder %s30, 3
      %s32 = scalar_select %p31, 0, %s30
      %s33 = ssub.s32 %s20, %s32
      %s34 = ssub.s32 %s21, %s28
      %s35 = sor.u32 %s33, %s34
      %p36 = scmp.eq.s32.totalorder %s35, 0
      %s38 = sadd.s32 %s37, 1
      %s39 = scalar_select %p36, %s37, %s38
      %p42 = pneg %p36
      %p43 = scmp.eq.s32.totalorder %s13, 8
      %p44 = por %p42, %p43
      %p45 = scmp.ne.s32.totalorder %s37, %s40
      %p46 = scmp.eq.s32.totalorder %s13, 0
      %p47 = por %p45, %p46
      %p48 = scmp.ne.s32.totalorder %s37, %s40
      %p49 = scmp.eq.s32.totalorder %s18, 8
      %p50 = por %p48, %p49
      %p51 = scmp.ne.s32.totalorder %s40, %s41
      %p52 = scmp.eq.s32.totalorder %s18, 0
      %p53 = por %p51, %p52
      %p54 = scmp.ne.s32.totalorder %s40, %s41
      %p55 = scmp.eq.s32.totalorder %s19, 8
      %p56 = por %p54, %p55
      %p58 = scmp.ne.s32.totalorder %s41, %s57
      %p59 = scmp.eq.s32.totalorder %s19, 0
      %p60 = por %p58, %p59
      %s62 = sadd.s32 %s61, 1
      %p65 = scmp.eq.s32.totalorder %s13, 8
      %p66 = scmp.ne.s32.totalorder %s61, %s63
      %p67 = scmp.eq.s32.totalorder %s13, 0
      %p68 = por %p66, %p67
      %p69 = scmp.ne.s32.totalorder %s61, %s63
      %p70 = scmp.eq.s32.totalorder %s18, 8
      %p71 = por %p69, %p70
      %p72 = scmp.ne.s32.totalorder %s63, %s64
      %p73 = scmp.eq.s32.totalorder %s18, 0
      %p74 = por %p72, %p73
      %p75 = scmp.ne.s32.totalorder %s63, %s64
      %p76 = scmp.eq.s32.totalorder %s19, 8
      %p77 = por %p75, %p76
      %p79 = scmp.ne.s32.totalorder %s64, %s78
      %p80 = scmp.eq.s32.totalorder %s19, 0
      %p81 = por %p79, %p80
      %s83 = sadd.s32 %s82, 1
      %p86 = scmp.eq.s32.totalorder %s13, 8
      %p87 = scmp.ne.s32.totalorder %s82, %s84
      %p88 = scmp.eq.s32.totalorder %s13, 0
      %p89 = por %p87, %p88
      %p90 = scmp.ne.s32.totalorder %s82, %s84
      %p91 = scmp.eq.s32.totalorder %s18, 8
      %p92 = por %p90, %p91
      %p93 = scmp.ne.s32.totalorder %s84, %s85
      %p94 = scmp.eq.s32.totalorder %s18, 0
      %p95 = por %p93, %p94
      %p96 = scmp.ne.s32.totalorder %s84, %s85
      %p97 = scmp.eq.s32.totalorder %s19, 8
      %p98 = por %p96, %p97
      %p100 = scmp.ne.s32.totalorder %s85, %s99
      %p101 = scmp.eq.s32.totalorder %s19, 0
      %p102 = por %p100, %p101
      %s104 = sadd.s32 %s103, 1
      %p107 = scmp.eq.s32.totalorder %s13, 8
      %p108 = scmp.ne.s32.totalorder %s103, %s105
      %p109 = scmp.eq.s32.totalorder %s13, 0
      %p110 = por %p108, %p109
      %p111 = scmp.ne.s32.totalorder %s103, %s105
      %p112 = scmp.eq.s32.totalorder %s18, 8
      %p113 = por %p111, %p112
      %p114 = scmp.ne.s32.totalorder %s105, %s106
      %p115 = scmp.eq.s32.totalorder %s18, 0
      %p116 = por %p114, %p115
      %p117 = scmp.ne.s32.totalorder %s105, %s106
      %p118 = scmp.eq.s32.totalorder %s19, 8
      %p119 = por %p117, %p118
      %p121 = scmp.ne.s32.totalorder %s106, %s120
      %p122 = scmp.eq.s32.totalorder %s19, 0
      %p123 = por %p121, %p122
      %s124 = ssub.s32 %s20, %s32
      %p125 = scmp.eq.s32.totalorder %s124, 0
      %s127 = sadd.s32 %s126, 1
      %s128 = scalar_select %p125, %s126, %s127
      %p131 = pneg %p125
      %p132 = scmp.eq.s32.totalorder %s13, 8
      %p133 = por %p131, %p132
      %p134 = scmp.ne.s32.totalorder %s126, %s129
      %p135 = scmp.eq.s32.totalorder %s13, 0
      %p136 = por %p134, %p135
      %p137 = scmp.ne.s32.totalorder %s126, %s129
      %p138 = scmp.eq.s32.totalorder %s18, 8
      %p139 = por %p137, %p138
      %p140 = scmp.ne.s32.totalorder %s129, %s130
      %p141 = scmp.eq.s32.totalorder %s18, 0
      %p142 = por %p140, %p141
      %p143 = scmp.ne.s32.totalorder %s129, %s130
      %p144 = scmp.eq.s32.totalorder %s19, 8
      %p145 = por %p143, %p144
      %p147 = scmp.ne.s32.totalorder %s130, %s146
      %p148 = scmp.eq.s32.totalorder %s19, 0
      %p149 = por %p147, %p148
      %p150 = scmp.le.s32.totalorder 1, %s13
      %p151 = scmp.lt.s32.totalorder %s13, 10
      %p152 = pnand %p150, %p151
      %p153 = pneg %p152
      // Predicated region
      $region9: #{gcn_forward.2} parent=5 // pred_check
        _
      $region10: #{gcn_forward.2} parent=5 // pred_check_branch
        %155 = sbr.rel (%p152) target = $region12
      $region11: #{gcn_forward.2} parent=5 // pred_region
        %s156 = ssub.s32 %s13, 1
        // Predicated region
        $region13: #{gcn_forward.2} parent=11 // pred_check
          %p157 = pneg %p74
        $region14: #{gcn_forward.2} parent=11 // pred_check_branch
          %159 = sbr.rel (%p157) target = $region16
        $region15: #{gcn_forward.2} parent=11 // pred_region
          _
        $region16: #{gcn_forward.2} parent=11 // pred_fallthru
          _
        // Predicated region
        $region17: #{gcn_forward.2} parent=11 // pred_check
          %p160 = pneg %p95
        $region18: #{gcn_forward.2} parent=11 // pred_check_branch
          %162 = sbr.rel (%p160) target = $region20
        $region19: #{gcn_forward.2} parent=11 // pred_region
          _
        $region20: #{gcn_forward.2} parent=11 // pred_fallthru
          _
        // Predicated region
        $region21: #{gcn_forward.2} parent=11 // pred_check
          %p163 = pneg %p116
        $region22: #{gcn_forward.2} parent=11 // pred_check_branch
          %165 = sbr.rel (%p163) target = $region24
        $region23: #{gcn_forward.2} parent=11 // pred_region
          _
        $region24: #{gcn_forward.2} parent=11 // pred_fallthru
          _
      $region12: #{gcn_forward.2} parent=5 // pred_fallthru
        _
      %p166 = scmp.lt.s32.totalorder %s13, 9
      // Predicated region
      $region25: #{gcn_forward.2} parent=5 // pred_check
        %p167 = pneg %p166
      $region26: #{gcn_forward.2} parent=5 // pred_check_branch
        %169 = sbr.rel (%p167) target = $region28
      $region27: #{gcn_forward.2} parent=5 // pred_region
        // Predicated region
        $region29: #{gcn_forward.2} parent=27 // pred_check
          %p170 = pneg %p47
        $region30: #{gcn_forward.2} parent=27 // pred_check_branch
          %172 = sbr.rel (%p170) target = $region32
        $region31: #{gcn_forward.2} parent=27 // pred_region
          %s173 = sand.u32 %s37, 1
          %s174 = scalar_lea.sflag [#allocation4], %s173
          %s175 = sand.u32 %s37, 1
          %s176 = smul.addr %s175, 256
          %s177 = scalar_lea.vmem [#allocation3], %s176
          %s178 = smul.u32 32, %s20
          %s179 = smul.u32 2, %s21
          %s181 = ssub.s32 4096, 4096
          %182 = vsyncadd %s174, %s181
          %s183 = smul.addr %s178, 6
          %s184 = sadd.s32 %s179, %s183
          %s185 = smul.addr %s184, 64
          %s186 = scalar_lea.hbm %s0, %s185
          %s187 = sshll.u32 %s177, 4
          %s188 = int_to_ptr.vmem [resolvable:$true] %s187
          %193 = dma.hbm_to_vmem [thread:$0]  %s186, 4096, %s188, %s174, 384, 128, 8
        $region32: #{gcn_forward.2} parent=27 // pred_fallthru
          _
      $region28: #{gcn_forward.2} parent=5 // pred_fallthru
        _
      %p194 = scmp.le.s32.totalorder 1, %s13
      %p195 = scmp.lt.s32.totalorder %s13, 10
      %p196 = pnand %p194, %p195
      %p197 = pneg %p196
      // Predicated region
      $region33: #{gcn_forward.2} parent=5 // pred_check
        _
      $region34: #{gcn_forward.2} parent=5 // pred_check_branch
        %199 = sbr.rel (%p196) target = $region36
      $region35: #{gcn_forward.2} parent=5 // pred_region
        %s200 = ssub.s32 %s13, 1
        %s201 = sand.u32 %s40, 1
        %s202 = scalar_lea.sflag [#allocation4], %s201
        %s203 = sand.u32 %s40, 1
        %s204 = smul.addr %s203, 256
        %s205 = scalar_lea.vmem [#allocation3], %s204
        // Predicated region
        $region37: #{gcn_forward.2} parent=35 // pred_check
          %p206 = pneg %p53
        $region38: #{gcn_forward.2} parent=35 // pred_check_branch
          %208 = sbr.rel (%p206) target = $region40
        $region39: #{gcn_forward.2} parent=35 // pred_region
          %209 = dma.done %s202, 4096
        $region40: #{gcn_forward.2} parent=35 // pred_fallthru
          _
        %s210 = sand.u32 %s40, 1
        %s211 = scalar_lea.sflag [#allocation4], %s210
        %s212 = sand.u32 %s40, 1
        %s213 = smul.addr %s212, 256
        %s214 = scalar_lea.vmem [#allocation3], %s213
        %p215 = pneg %p53
        %p216 = pneg %p50
        %p217 = pneg %p74
        %p218 = pneg %p71
        %p219 = pneg %p95
        %p220 = pneg %p92
        %p221 = pneg %p116
        %p222 = pneg %p113
        %p223 = pneg %p142
        %p224 = pneg %p139
        %s225 = smul.u32 32, %s22
        %p226 = scmp.lt.s32.totalorder %s225, 95
        %s227 = scalar_select %p226, %s225, 95
        %s228 = smul.addr %s227, 4
        %s229 = scalar_lea.vmem %s4, %s228
        %s230 = smul.u32 32, %s22
        %s231 = smul.u32 2, %s23
        %s232 = smul.u32 32, %s22
        %p233 = scmp.lt.s32.totalorder %s232, 95
        %s234 = scalar_select %p233, %s232, 95
        %s235 = smul.addr %s234, 4
        %s236 = scalar_lea.vmem %s4, %s235
        %s237 = smul.u32 32, %s22
        %p239 = scmp.eq.s32.totalorder %s23, 0
        // Predicated region
        $region41: #{gcn_forward.2} parent=35 // pred_check
          %p240 = pneg %p239
        $region42: #{gcn_forward.2} parent=35 // pred_check_branch
          %242 = sbr.rel (%p240) target = $region44
        $region43: #{gcn_forward.2} parent=35 // pred_region
          %243 = vst [vmem:[#allocation2] sm:$0xff] 0.0
          %244 = vst [vmem:[#allocation2 + $0x8] sm:$0xff] 0.0
          %245 = vst [vmem:[#allocation2 + $0x10] sm:$0xff] 0.0
          %246 = vst [vmem:[#allocation2 + $0x18] sm:$0xff] 0.0
          %247 = vst [vmem:[#allocation2 + $0x20] sm:$0xff] 0.0
          %248 = vst [vmem:[#allocation2 + $0x28] sm:$0xff] 0.0
          %249 = vst [vmem:[#allocation2 + $0x30] sm:$0xff] 0.0
          %250 = vst [vmem:[#allocation2 + $0x38] sm:$0xff] 0.0
          %251 = vst [vmem:[#allocation2 + $0x40] sm:$0xff] 0.0
          %252 = vst [vmem:[#allocation2 + $0x48] sm:$0xff] 0.0
          %253 = vst [vmem:[#allocation2 + $0x50] sm:$0xff] 0.0
          %254 = vst [vmem:[#allocation2 + $0x58] sm:$0xff] 0.0
          %255 = vst [vmem:[#allocation2 + $0x60] sm:$0xff] 0.0
          %256 = vst [vmem:[#allocation2 + $0x68] sm:$0xff] 0.0
          %257 = vst [vmem:[#allocation2 + $0x70] sm:$0xff] 0.0
          %258 = vst [vmem:[#allocation2 + $0x78] sm:$0xff] 0.0
          %259 = vst [vmem:[#allocation2 + $0x80] sm:$0xff] 0.0
          %260 = vst [vmem:[#allocation2 + $0x88] sm:$0xff] 0.0
          %261 = vst [vmem:[#allocation2 + $0x90] sm:$0xff] 0.0
          %262 = vst [vmem:[#allocation2 + $0x98] sm:$0xff] 0.0
          %263 = vst [vmem:[#allocation2 + $0xa0] sm:$0xff] 0.0
          %264 = vst [vmem:[#allocation2 + $0xa8] sm:$0xff] 0.0
          %265 = vst [vmem:[#allocation2 + $0xb0] sm:$0xff] 0.0
          %266 = vst [vmem:[#allocation2 + $0xb8] sm:$0xff] 0.0
          %267 = vst [vmem:[#allocation2 + $0xc0] sm:$0xff] 0.0
          %268 = vst [vmem:[#allocation2 + $0xc8] sm:$0xff] 0.0
          %269 = vst [vmem:[#allocation2 + $0xd0] sm:$0xff] 0.0
          %270 = vst [vmem:[#allocation2 + $0xd8] sm:$0xff] 0.0
          %271 = vst [vmem:[#allocation2 + $0xe0] sm:$0xff] 0.0
          %272 = vst [vmem:[#allocation2 + $0xe8] sm:$0xff] 0.0
          %273 = vst [vmem:[#allocation2 + $0xf0] sm:$0xff] 0.0
          %274 = vst [vmem:[#allocation2 + $0xf8] sm:$0xff] 0.0
        $region44: #{gcn_forward.2} parent=35 // pred_fallthru
          _
        %s275 = smul.u32 %s23, 256
        %v276 = vld [vmem:[#allocation2] sm:$0xff]
        %v277 = vld [vmem:[#allocation2 + $0x8] sm:$0xff]
        %v278 = vld [vmem:[#allocation2 + $0x10] sm:$0xff]
        %v279 = vld [vmem:[#allocation2 + $0x18] sm:$0xff]
        %v280 = vld [vmem:[#allocation2 + $0x20] sm:$0xff]
        %v281 = vld [vmem:[#allocation2 + $0x28] sm:$0xff]
        %v282 = vld [vmem:[#allocation2 + $0x30] sm:$0xff]
        %v283 = vld [vmem:[#allocation2 + $0x38] sm:$0xff]
        %v284 = vld [vmem:[#allocation2 + $0x40] sm:$0xff]
        %v285 = vld [vmem:[#allocation2 + $0x48] sm:$0xff]
        %v286 = vld [vmem:[#allocation2 + $0x50] sm:$0xff]
        %v287 = vld [vmem:[#allocation2 + $0x58] sm:$0xff]
        %v288 = vld [vmem:[#allocation2 + $0x60] sm:$0xff]
        %v289 = vld [vmem:[#allocation2 + $0x68] sm:$0xff]
        %v290 = vld [vmem:[#allocation2 + $0x70] sm:$0xff]
        %v291 = vld [vmem:[#allocation2 + $0x78] sm:$0xff]
        %v292 = vld [vmem:[#allocation2 + $0x80] sm:$0xff]
        %v293 = vld [vmem:[#allocation2 + $0x88] sm:$0xff]
        %v294 = vld [vmem:[#allocation2 + $0x90] sm:$0xff]
        %v295 = vld [vmem:[#allocation2 + $0x98] sm:$0xff]
        %v296 = vld [vmem:[#allocation2 + $0xa0] sm:$0xff]
        %v297 = vld [vmem:[#allocation2 + $0xa8] sm:$0xff]
        %v298 = vld [vmem:[#allocation2 + $0xb0] sm:$0xff]
        %v299 = vld [vmem:[#allocation2 + $0xb8] sm:$0xff]
        %v300 = vld [vmem:[#allocation2 + $0xc0] sm:$0xff]
        %v301 = vld [vmem:[#allocation2 + $0xc8] sm:$0xff]
        %v302 = vld [vmem:[#allocation2 + $0xd0] sm:$0xff]
        %v303 = vld [vmem:[#allocation2 + $0xd8] sm:$0xff]
        %v304 = vld [vmem:[#allocation2 + $0xe0] sm:$0xff]
        %v305 = vld [vmem:[#allocation2 + $0xe8] sm:$0xff]
        %v306 = vld [vmem:[#allocation2 + $0xf0] sm:$0xff]
        %v307 = vld [vmem:[#allocation2 + $0xf8] sm:$0xff]
        %v308 = vld [vmem:[%s205] sm:$0xff]
        %v309 = vld [vmem:[%s205 + $0x8] sm:$0xff]
        %v310 = vld [vmem:[%s205 + $0x10] sm:$0xff]
        %v311 = vld [vmem:[%s205 + $0x18] sm:$0xff]
        %v312 = vld [vmem:[%s205 + $0x20] sm:$0xff]
        %v313 = vld [vmem:[%s205 + $0x28] sm:$0xff]
        %v314 = vld [vmem:[%s205 + $0x30] sm:$0xff]
        %v315 = vld [vmem:[%s205 + $0x38] sm:$0xff]
        %v316 = vld [vmem:[%s205 + $0x40] sm:$0xff]
        %v317 = vld [vmem:[%s205 + $0x48] sm:$0xff]
        %v318 = vld [vmem:[%s205 + $0x50] sm:$0xff]
        %v319 = vld [vmem:[%s205 + $0x58] sm:$0xff]
        %v320 = vld [vmem:[%s205 + $0x60] sm:$0xff]
        %v321 = vld [vmem:[%s205 + $0x68] sm:$0xff]
        %v322 = vld [vmem:[%s205 + $0x70] sm:$0xff]
        %v323 = vld [vmem:[%s205 + $0x78] sm:$0xff]
        %v324 = vld [vmem:[%s205 + $0x80] sm:$0xff]
        %v325 = vld [vmem:[%s205 + $0x88] sm:$0xff]
        %v326 = vld [vmem:[%s205 + $0x90] sm:$0xff]
        %v327 = vld [vmem:[%s205 + $0x98] sm:$0xff]
        %v328 = vld [vmem:[%s205 + $0xa0] sm:$0xff]
        %v329 = vld [vmem:[%s205 + $0xa8] sm:$0xff]
        %v330 = vld [vmem:[%s205 + $0xb0] sm:$0xff]
        %v331 = vld [vmem:[%s205 + $0xb8] sm:$0xff]
        %v332 = vld [vmem:[%s205 + $0xc0] sm:$0xff]
        %v333 = vld [vmem:[%s205 + $0xc8] sm:$0xff]
        %v334 = vld [vmem:[%s205 + $0xd0] sm:$0xff]
        %v335 = vld [vmem:[%s205 + $0xd8] sm:$0xff]
        %v336 = vld [vmem:[%s205 + $0xe0] sm:$0xff]
        %v337 = vld [vmem:[%s205 + $0xe8] sm:$0xff]
        %v338 = vld [vmem:[%s205 + $0xf0] sm:$0xff]
        %v339 = vld [vmem:[%s205 + $0xf8] sm:$0xff]
        %s340 = sshra.s32 %s275, 3
        %s341 = sand.u32 %s275, 7
        %s342 = smul.addr %s340, 4
        %s343 = scalar_lea.vmem %s1, %s342
        %v344 = vld [vmem:[%s343] sm:$0xf]
        %v345 = vld [vmem:[%s343 + $0x4] sm:$0xf]
        %v346 = vld [vmem:[%s343 + $0x8] sm:$0xf]
        %v347 = vld [vmem:[%s343 + $0xc] sm:$0xf]
        %v348 = vld [vmem:[%s343 + $0x10] sm:$0xf]
        %v349 = vld [vmem:[%s343 + $0x14] sm:$0xf]
        %v350 = vld [vmem:[%s343 + $0x18] sm:$0xf]
        %v351 = vld [vmem:[%s343 + $0x1c] sm:$0xf]
        %v352 = vld [vmem:[%s343 + $0x20] sm:$0xf]
        %v353 = vld [vmem:[%s343 + $0x24] sm:$0xf]
        %v354 = vld [vmem:[%s343 + $0x28] sm:$0xf]
        %v355 = vld [vmem:[%s343 + $0x2c] sm:$0xf]
        %v356 = vld [vmem:[%s343 + $0x30] sm:$0xf]
        %v357 = vld [vmem:[%s343 + $0x34] sm:$0xf]
        %v358 = vld [vmem:[%s343 + $0x38] sm:$0xf]
        %v359 = vld [vmem:[%s343 + $0x3c] sm:$0xf]
        %v360 = vld [vmem:[%s343 + $0x40] sm:$0xf]
        %v361 = vld [vmem:[%s343 + $0x44] sm:$0xf]
        %v362 = vld [vmem:[%s343 + $0x48] sm:$0xf]
        %v363 = vld [vmem:[%s343 + $0x4c] sm:$0xf]
        %v364 = vld [vmem:[%s343 + $0x50] sm:$0xf]
        %v365 = vld [vmem:[%s343 + $0x54] sm:$0xf]
        %v366 = vld [vmem:[%s343 + $0x58] sm:$0xf]
        %v367 = vld [vmem:[%s343 + $0x5c] sm:$0xf]
        %v368 = vld [vmem:[%s343 + $0x60] sm:$0xf]
        %v369 = vld [vmem:[%s343 + $0x64] sm:$0xf]
        %v370 = vld [vmem:[%s343 + $0x68] sm:$0xf]
        %v371 = vld [vmem:[%s343 + $0x6c] sm:$0xf]
        %v372 = vld [vmem:[%s343 + $0x70] sm:$0xf]
        %v373 = vld [vmem:[%s343 + $0x74] sm:$0xf]
        %v374 = vld [vmem:[%s343 + $0x78] sm:$0xf]
        %v375 = vld [vmem:[%s343 + $0x7c] sm:$0xf]
        %v408 = vunpack.c.l.b16 %v308
        %v409 = vunpack.c.h.b16 %v308
        %v410 = vunpack.c.l.b16 %v309
        %v411 = vunpack.c.h.b16 %v309
        %v412 = vunpack.c.l.b16 %v310
        %v413 = vunpack.c.h.b16 %v310
        %v414 = vunpack.c.l.b16 %v311
        %v415 = vunpack.c.h.b16 %v311
        %v416 = vunpack.c.l.b16 %v312
        %v417 = vunpack.c.h.b16 %v312
        %v418 = vunpack.c.l.b16 %v313
        %v419 = vunpack.c.h.b16 %v313
        %v420 = vunpack.c.l.b16 %v314
        %v421 = vunpack.c.h.b16 %v314
        %v422 = vunpack.c.l.b16 %v315
        %v423 = vunpack.c.h.b16 %v315
        %v424 = vunpack.c.l.b16 %v316
        %v425 = vunpack.c.h.b16 %v316
        %v426 = vunpack.c.l.b16 %v317
        %v427 = vunpack.c.h.b16 %v317
        %v428 = vunpack.c.l.b16 %v318
        %v429 = vunpack.c.h.b16 %v318
        %v430 = vunpack.c.l.b16 %v319
        %v431 = vunpack.c.h.b16 %v319
        %v432 = vunpack.c.l.b16 %v320
        %v433 = vunpack.c.h.b16 %v320
        %v434 = vunpack.c.l.b16 %v321
        %v435 = vunpack.c.h.b16 %v321
        %v436 = vunpack.c.l.b16 %v322
        %v437 = vunpack.c.h.b16 %v322
        %v438 = vunpack.c.l.b16 %v323
        %v439 = vunpack.c.h.b16 %v323
        %v440 = vunpack.c.l.b16 %v324
        %v441 = vunpack.c.h.b16 %v324
        %v442 = vunpack.c.l.b16 %v325
        %v443 = vunpack.c.h.b16 %v325
        %v444 = vunpack.c.l.b16 %v326
        %v445 = vunpack.c.h.b16 %v326
        %v446 = vunpack.c.l.b16 %v327
        %v447 = vunpack.c.h.b16 %v327
        %v448 = vunpack.c.l.b16 %v328
        %v449 = vunpack.c.h.b16 %v328
        %v450 = vunpack.c.l.b16 %v329
        %v451 = vunpack.c.h.b16 %v329
        %v452 = vunpack.c.l.b16 %v330
        %v453 = vunpack.c.h.b16 %v330
        %v454 = vunpack.c.l.b16 %v331
        %v455 = vunpack.c.h.b16 %v331
        %v456 = vunpack.c.l.b16 %v332
        %v457 = vunpack.c.h.b16 %v332
        %v458 = vunpack.c.l.b16 %v333
        %v459 = vunpack.c.h.b16 %v333
        %v460 = vunpack.c.l.b16 %v334
        %v461 = vunpack.c.h.b16 %v334
        %v462 = vunpack.c.l.b16 %v335
        %v463 = vunpack.c.h.b16 %v335
        %v464 = vunpack.c.l.b16 %v336
        %v465 = vunpack.c.h.b16 %v336
        %v466 = vunpack.c.l.b16 %v337
        %v467 = vunpack.c.h.b16 %v337
        %v468 = vunpack.c.l.b16 %v338
        %v469 = vunpack.c.h.b16 %v338
        %v470 = vunpack.c.l.b16 %v339
        %v471 = vunpack.c.h.b16 %v339
        %v472 = vpack.c.b16 %v410, %v408
        %v473 = vpack.c.b16 %v411, %v409
        %v474 = vpack.c.b16 %v414, %v412
        %v475 = vpack.c.b16 %v415, %v413
        %v476 = vpack.c.b16 %v418, %v416
        %v477 = vpack.c.b16 %v419, %v417
        %v478 = vpack.c.b16 %v422, %v420
        %v479 = vpack.c.b16 %v423, %v421
        %v480 = vpack.c.b16 %v426, %v424
        %v481 = vpack.c.b16 %v427, %v425
        %v482 = vpack.c.b16 %v430, %v428
        %v483 = vpack.c.b16 %v431, %v429
        %v484 = vpack.c.b16 %v434, %v432
        %v485 = vpack.c.b16 %v435, %v433
        %v486 = vpack.c.b16 %v438, %v436
        %v487 = vpack.c.b16 %v439, %v437
        %v488 = vpack.c.b16 %v442, %v440
        %v489 = vpack.c.b16 %v443, %v441
        %v490 = vpack.c.b16 %v446, %v444
        %v491 = vpack.c.b16 %v447, %v445
        %v492 = vpack.c.b16 %v450, %v448
        %v493 = vpack.c.b16 %v451, %v449
        %v494 = vpack.c.b16 %v454, %v452
        %v495 = vpack.c.b16 %v455, %v453
        %v496 = vpack.c.b16 %v458, %v456
        %v497 = vpack.c.b16 %v459, %v457
        %v498 = vpack.c.b16 %v462, %v460
        %v499 = vpack.c.b16 %v463, %v461
        %v500 = vpack.c.b16 %v466, %v464
        %v501 = vpack.c.b16 %v467, %v465
        %v502 = vpack.c.b16 %v470, %v468
        %v503 = vpack.c.b16 %v471, %v469
        %v568 = vunpack.c.l.b16 %v344
        %v569 = vunpack.c.l.b16 %v345
        %v570 = vunpack.c.l.b16 %v346
        %v571 = vunpack.c.l.b16 %v347
        %v572 = vunpack.c.l.b16 %v348
        %v573 = vunpack.c.l.b16 %v349
        %v574 = vunpack.c.l.b16 %v350
        %v575 = vunpack.c.l.b16 %v351
        %v576 = vunpack.c.l.b16 %v352
        %v577 = vunpack.c.l.b16 %v353
        %v578 = vunpack.c.l.b16 %v354
        %v579 = vunpack.c.l.b16 %v355
        %v580 = vunpack.c.l.b16 %v356
        %v581 = vunpack.c.l.b16 %v357
        %v582 = vunpack.c.l.b16 %v358
        %v583 = vunpack.c.l.b16 %v359
        %v584 = vunpack.c.l.b16 %v360
        %v585 = vunpack.c.l.b16 %v361
        %v586 = vunpack.c.l.b16 %v362
        %v587 = vunpack.c.l.b16 %v363
        %v588 = vunpack.c.l.b16 %v364
        %v589 = vunpack.c.l.b16 %v365
        %v590 = vunpack.c.l.b16 %v366
        %v591 = vunpack.c.l.b16 %v367
        %v592 = vunpack.c.l.b16 %v368
        %v593 = vunpack.c.l.b16 %v369
        %v594 = vunpack.c.l.b16 %v370
        %v595 = vunpack.c.l.b16 %v371
        %v596 = vunpack.c.l.b16 %v372
        %v597 = vunpack.c.l.b16 %v373
        %v598 = vunpack.c.l.b16 %v374
        %v599 = vunpack.c.l.b16 %v375
        %v600 = vpack.c.b16 %v569, %v568
        %v601 = vpack.c.b16 %v571, %v570
        %v602 = vpack.c.b16 %v573, %v572
        %v603 = vpack.c.b16 %v575, %v574
        %v604 = vpack.c.b16 %v577, %v576
        %v605 = vpack.c.b16 %v579, %v578
        %v606 = vpack.c.b16 %v581, %v580
        %v607 = vpack.c.b16 %v583, %v582
        %v608 = vpack.c.b16 %v585, %v584
        %v609 = vpack.c.b16 %v587, %v586
        %v610 = vpack.c.b16 %v589, %v588
        %v611 = vpack.c.b16 %v591, %v590
        %v612 = vpack.c.b16 %v593, %v592
        %v613 = vpack.c.b16 %v595, %v594
        %v614 = vpack.c.b16 %v597, %v596
        %v615 = vpack.c.b16 %v599, %v598
        %632 = vmatprep.subr.bf16.mxu0 0
        %633 = vmatpush1.bf16.msra.mxu0 %v600
        %634 = vmatprep.subr.bf16.mxu0 0
        %635 = vmatpush1.bf16.msra.mxu0 %v601
        %636 = vmatprep.subr.bf16.mxu0 0
        %637 = vmatpush1.bf16.msra.mxu0 %v602
        %638 = vmatprep.subr.bf16.mxu0 0
        %639 = vmatpush1.bf16.msra.mxu0 %v603
        %640 = vmatprep.subr.bf16.mxu0 0
        %641 = vmatpush1.bf16.msra.mxu0 %v604
        %642 = vmatprep.subr.bf16.mxu0 0
        %643 = vmatpush1.bf16.msra.mxu0 %v605
        %644 = vmatprep.subr.bf16.mxu0 0
        %645 = vmatpush1.bf16.msra.mxu0 %v606
        %646 = vmatprep.subr.bf16.mxu0 0
        %647 = vmatpush1.bf16.msra.mxu0 %v607
        %648 = vmatprep.subr.bf16.mxu0 0
        %649 = vmatpush1.bf16.msra.mxu0 %v608
        %650 = vmatprep.subr.bf16.mxu0 0
        %651 = vmatpush1.bf16.msra.mxu0 %v609
        %652 = vmatprep.subr.bf16.mxu0 0
        %653 = vmatpush1.bf16.msra.mxu0 %v610
        %654 = vmatprep.subr.bf16.mxu0 0
        %655 = vmatpush1.bf16.msra.mxu0 %v611
        %656 = vmatprep.subr.bf16.mxu0 0
        %657 = vmatpush1.bf16.msra.mxu0 %v612
        %658 = vmatprep.subr.bf16.mxu0 0
        %659 = vmatpush1.bf16.msra.mxu0 %v613
        %660 = vmatprep.subr.bf16.mxu0 0
        %661 = vmatpush1.bf16.msra.mxu0 %v614
        %662 = vmatprep.subr.bf16.mxu0 0
        %663 = vmatpush1.bf16.msra.mxu0 %v615
        %664 = vmatprep.mubr.bf16.mxu0 %v473
        %665 = vmatmul.mubr.bf16.gmra.mrb[0].mxu0 %v472
        %v666 = vpop.f32.mrb[0].mxu0
        %v667 = vadd.f32 0.0, %v666
        %v668 = vpop.f32.mrb[0].mxu0
        %v669 = vpop.f32.mrb[0].mxu0
        %v670 = vadd.f32 0.0, %v669
        %v671 = vpop.f32.mrb[0].mxu0
        %672 = vmatprep.mubr.bf16.mxu0 %v475
        %673 = vmatmul.mubr.bf16.gmra.mrb[0].mxu0 %v474
        %v674 = vpop.f32.mrb[0].mxu0
        %v675 = vadd.f32 0.0, %v674
        %v676 = vpop.f32.mrb[0].mxu0
        %v677 = vpop.f32.mrb[0].mxu0
        %v678 = vadd.f32 0.0, %v677
        %v679 = vpop.f32.mrb[0].mxu0
        %680 = vmatprep.mubr.bf16.mxu0 %v477
        %681 = vmatmul.mubr.bf16.gmra.mrb[0].mxu0 %v476
        %v682 = vpop.f32.mrb[0].mxu0
        %v683 = vadd.f32 0.0, %v682
        %v684 = vpop.f32.mrb[0].mxu0
        %v685 = vpop.f32.mrb[0].mxu0
        %v686 = vadd.f32 0.0, %v685
        %v687 = vpop.f32.mrb[0].mxu0
        %688 = vmatprep.mubr.bf16.mxu0 %v479
        %689 = vmatmul.mubr.bf16.gmra.mrb[0].mxu0 %v478
        %v690 = vpop.f32.mrb[0].mxu0
        %v691 = vadd.f32 0.0, %v690
        %v692 = vpop.f32.mrb[0].mxu0
        %v693 = vpop.f32.mrb[0].mxu0
        %v694 = vadd.f32 0.0, %v693
        %v695 = vpop.f32.mrb[0].mxu0
        %696 = vmatprep.mubr.bf16.mxu0 %v481
        %697 = vmatmul.mubr.bf16.gmra.mrb[0].mxu0 %v480
        %v698 = vpop.f32.mrb[0].mxu0
        %v699 = vadd.f32 0.0, %v698
        %v700 = vpop.f32.mrb[0].mxu0
        %v701 = vpop.f32.mrb[0].mxu0
        %v702 = vadd.f32 0.0, %v701
        %v703 = vpop.f32.mrb[0].mxu0
        %704 = vmatprep.mubr.bf16.mxu0 %v483
        %705 = vmatmul.mubr.bf16.gmra.mrb[0].mxu0 %v482
        %v706 = vpop.f32.mrb[0].mxu0
        %v707 = vadd.f32 0.0, %v706
        %v708 = vpop.f32.mrb[0].mxu0
        %v709 = vpop.f32.mrb[0].mxu0
        %v710 = vadd.f32 0.0, %v709
        %v711 = vpop.f32.mrb[0].mxu0
        %712 = vmatprep.mubr.bf16.mxu0 %v485
        %713 = vmatmul.mubr.bf16.gmra.mrb[0].mxu0 %v484
        %v714 = vpop.f32.mrb[0].mxu0
        %v715 = vadd.f32 0.0, %v714
        %v716 = vpop.f32.mrb[0].mxu0
        %v717 = vpop.f32.mrb[0].mxu0
        %v718 = vadd.f32 0.0, %v717
        %v719 = vpop.f32.mrb[0].mxu0
        %720 = vmatprep.mubr.bf16.mxu0 %v487
        %721 = vmatmul.mubr.bf16.gmra.mrb[0].mxu0 %v486
        %v722 = vpop.f32.mrb[0].mxu0
        %v723 = vadd.f32 0.0, %v722
        %v724 = vpop.f32.mrb[0].mxu0
        %v725 = vpop.f32.mrb[0].mxu0
        %v726 = vadd.f32 0.0, %v725
        %v727 = vpop.f32.mrb[0].mxu0
        %728 = vmatprep.mubr.bf16.mxu0 %v489
        %729 = vmatmul.mubr.bf16.gmra.mrb[0].mxu0 %v488
        %v730 = vpop.f32.mrb[0].mxu0
        %v731 = vadd.f32 0.0, %v730
        %v732 = vpop.f32.mrb[0].mxu0
        %v733 = vpop.f32.mrb[0].mxu0
        %v734 = vadd.f32 0.0, %v733
        %v735 = vpop.f32.mrb[0].mxu0
        %736 = vmatprep.mubr.bf16.mxu0 %v491
        %737 = vmatmul.mubr.bf16.gmra.mrb[0].mxu0 %v490
        %v738 = vpop.f32.mrb[0].mxu0
        %v739 = vadd.f32 0.0, %v738
        %v740 = vpop.f32.mrb[0].mxu0
        %v741 = vpop.f32.mrb[0].mxu0
        %v742 = vadd.f32 0.0, %v741
        %v743 = vpop.f32.mrb[0].mxu0
        %744 = vmatprep.mubr.bf16.mxu0 %v493
        %745 = vmatmul.mubr.bf16.gmra.mrb[0].mxu0 %v492
        %v746 = vpop.f32.mrb[0].mxu0
        %v747 = vadd.f32 0.0, %v746
        %v748 = vpop.f32.mrb[0].mxu0
        %v749 = vpop.f32.mrb[0].mxu0
        %v750 = vadd.f32 0.0, %v749
        %v751 = vpop.f32.mrb[0].mxu0
        %752 = vmatprep.mubr.bf16.mxu0 %v495
        %753 = vmatmul.mubr.bf16.gmra.mrb[0].mxu0 %v494
        %v754 = vpop.f32.mrb[0].mxu0
        %v755 = vadd.f32 0.0, %v754
        %v756 = vpop.f32.mrb[0].mxu0
        %v757 = vpop.f32.mrb[0].mxu0
        %v758 = vadd.f32 0.0, %v757
        %v759 = vpop.f32.mrb[0].mxu0
        %760 = vmatprep.mubr.bf16.mxu0 %v497
        %761 = vmatmul.mubr.bf16.gmra.mrb[0].mxu0 %v496
        %v762 = vpop.f32.mrb[0].mxu0
        %v763 = vadd.f32 0.0, %v762
        %v764 = vpop.f32.mrb[0].mxu0
        %v765 = vpop.f32.mrb[0].mxu0
        %v766 = vadd.f32 0.0, %v765
        %v767 = vpop.f32.mrb[0].mxu0
        %768 = vmatprep.mubr.bf16.mxu0 %v499
        %769 = vmatmul.mubr.bf16.gmra.mrb[0].mxu0 %v498
        %v770 = vpop.f32.mrb[0].mxu0
        %v771 = vadd.f32 0.0, %v770
        %v772 = vpop.f32.mrb[0].mxu0
        %v773 = vpop.f32.mrb[0].mxu0
        %v774 = vadd.f32 0.0, %v773
        %v775 = vpop.f32.mrb[0].mxu0
        %776 = vmatprep.mubr.bf16.mxu0 %v501
        %777 = vmatmul.mubr.bf16.gmra.mrb[0].mxu0 %v500
        %v778 = vpop.f32.mrb[0].mxu0
        %v779 = vadd.f32 0.0, %v778
        %v780 = vpop.f32.mrb[0].mxu0
        %v781 = vpop.f32.mrb[0].mxu0
        %v782 = vadd.f32 0.0, %v781
        %v783 = vpop.f32.mrb[0].mxu0
        %784 = vmatprep.mubr.bf16.mxu0 %v503
        %785 = vmatmul.mubr.bf16.gmra.mrb[0].mxu0 %v502
        %v786 = vpop.f32.mrb[0].mxu0
        %v787 = vadd.f32 0.0, %v786
        %v788 = vpop.f32.mrb[0].mxu0
        %v789 = vpop.f32.mrb[0].mxu0
        %v790 = vadd.f32 0.0, %v789
        %v791 = vpop.f32.mrb[0].mxu0
        %792 = vdwg.mxu0
        %v793 = vadd.f32 %v276, %v667
        %v794 = vadd.f32 %v277, %v670
        %v795 = vadd.f32 %v278, %v675
        %v796 = vadd.f32 %v279, %v678
        %v797 = vadd.f32 %v280, %v683
        %v798 = vadd.f32 %v281, %v686
        %v799 = vadd.f32 %v282, %v691
        %v800 = vadd.f32 %v283, %v694
        %v801 = vadd.f32 %v284, %v699
        %v802 = vadd.f32 %v285, %v702
        %v803 = vadd.f32 %v286, %v707
        %v804 = vadd.f32 %v287, %v710
        %v805 = vadd.f32 %v288, %v715
        %v806 = vadd.f32 %v289, %v718
        %v807 = vadd.f32 %v290, %v723
        %v808 = vadd.f32 %v291, %v726
        %v809 = vadd.f32 %v292, %v731
        %v810 = vadd.f32 %v293, %v734
        %v811 = vadd.f32 %v294, %v739
        %v812 = vadd.f32 %v295, %v742
        %v813 = vadd.f32 %v296, %v747
        %v814 = vadd.f32 %v297, %v750
        %v815 = vadd.f32 %v298, %v755
        %v816 = vadd.f32 %v299, %v758
        %v817 = vadd.f32 %v300, %v763
        %v818 = vadd.f32 %v301, %v766
        %v819 = vadd.f32 %v302, %v771
        %v820 = vadd.f32 %v303, %v774
        %v821 = vadd.f32 %v304, %v779
        %v822 = vadd.f32 %v305, %v782
        %v823 = vadd.f32 %v306, %v787
        %v824 = vadd.f32 %v307, %v790
        %825 = vst [vmem:[#allocation2] sm:$0xff] %v793
        %826 = vst [vmem:[#allocation2 + $0x8] sm:$0xff] %v794
        %827 = vst [vmem:[#allocation2 + $0x10] sm:$0xff] %v795
        %828 = vst [vmem:[#allocation2 + $0x18] sm:$0xff] %v796
        %829 = vst [vmem:[#allocation2 + $0x20] sm:$0xff] %v797
        %830 = vst [vmem:[#allocation2 + $0x28] sm:$0xff] %v798
        %831 = vst [vmem:[#allocation2 + $0x30] sm:$0xff] %v799
        %832 = vst [vmem:[#allocation2 + $0x38] sm:$0xff] %v800
        %833 = vst [vmem:[#allocation2 + $0x40] sm:$0xff] %v801
        %834 = vst [vmem:[#allocation2 + $0x48] sm:$0xff] %v802
        %835 = vst [vmem:[#allocation2 + $0x50] sm:$0xff] %v803
        %836 = vst [vmem:[#allocation2 + $0x58] sm:$0xff] %v804
        %837 = vst [vmem:[#allocation2 + $0x60] sm:$0xff] %v805
        %838 = vst [vmem:[#allocation2 + $0x68] sm:$0xff] %v806
        %839 = vst [vmem:[#allocation2 + $0x70] sm:$0xff] %v807
        %840 = vst [vmem:[#allocation2 + $0x78] sm:$0xff] %v808
        %841 = vst [vmem:[#allocation2 + $0x80] sm:$0xff] %v809
        %842 = vst [vmem:[#allocation2 + $0x88] sm:$0xff] %v810
        %843 = vst [vmem:[#allocation2 + $0x90] sm:$0xff] %v811
        %844 = vst [vmem:[#allocation2 + $0x98] sm:$0xff] %v812
        %845 = vst [vmem:[#allocation2 + $0xa0] sm:$0xff] %v813
        %846 = vst [vmem:[#allocation2 + $0xa8] sm:$0xff] %v814
        %847 = vst [vmem:[#allocation2 + $0xb0] sm:$0xff] %v815
        %848 = vst [vmem:[#allocation2 + $0xb8] sm:$0xff] %v816
        %849 = vst [vmem:[#allocation2 + $0xc0] sm:$0xff] %v817
        %850 = vst [vmem:[#allocation2 + $0xc8] sm:$0xff] %v818
        %851 = vst [vmem:[#allocation2 + $0xd0] sm:$0xff] %v819
        %852 = vst [vmem:[#allocation2 + $0xd8] sm:$0xff] %v820
        %853 = vst [vmem:[#allocation2 + $0xe0] sm:$0xff] %v821
        %854 = vst [vmem:[#allocation2 + $0xe8] sm:$0xff] %v822
        %855 = vst [vmem:[#allocation2 + $0xf0] sm:$0xff] %v823
        %856 = vst [vmem:[#allocation2 + $0xf8] sm:$0xff] %v824
        %p857 = scmp.eq.s32.totalorder %s23, 2
        // Predicated region
        $region45: #{gcn_forward.2} parent=35 // pred_check
          %p858 = pneg %p857
        $region46: #{gcn_forward.2} parent=35 // pred_check_branch
          %860 = sbr.rel (%p858) target = $region48
        $region47: #{gcn_forward.2} parent=35 // pred_region
          %v861 = vld [vmem:[#allocation2] sm:$0xff]
          %v862 = vld [vmem:[#allocation2 + $0x8] sm:$0xff]
          %v863 = vld [vmem:[#allocation2 + $0x10] sm:$0xff]
          %v864 = vld [vmem:[#allocation2 + $0x18] sm:$0xff]
          %v865 = vld [vmem:[#allocation2 + $0x20] sm:$0xff]
          %v866 = vld [vmem:[#allocation2 + $0x28] sm:$0xff]
          %v867 = vld [vmem:[#allocation2 + $0x30] sm:$0xff]
          %v868 = vld [vmem:[#allocation2 + $0x38] sm:$0xff]
          %v869 = vld [vmem:[#allocation2 + $0x40] sm:$0xff]
          %v870 = vld [vmem:[#allocation2 + $0x48] sm:$0xff]
          %v871 = vld [vmem:[#allocation2 + $0x50] sm:$0xff]
          %v872 = vld [vmem:[#allocation2 + $0x58] sm:$0xff]
          %v873 = vld [vmem:[#allocation2 + $0x60] sm:$0xff]
          %v874 = vld [vmem:[#allocation2 + $0x68] sm:$0xff]
          %v875 = vld [vmem:[#allocation2 + $0x70] sm:$0xff]
          %v876 = vld [vmem:[#allocation2 + $0x78] sm:$0xff]
          %v877 = vld [vmem:[#allocation2 + $0x80] sm:$0xff]
          %v878 = vld [vmem:[#allocation2 + $0x88] sm:$0xff]
          %v879 = vld [vmem:[#allocation2 + $0x90] sm:$0xff]
          %v880 = vld [vmem:[#allocation2 + $0x98] sm:$0xff]
          %v881 = vld [vmem:[#allocation2 + $0xa0] sm:$0xff]
          %v882 = vld [vmem:[#allocation2 + $0xa8] sm:$0xff]
          %v883 = vld [vmem:[#allocation2 + $0xb0] sm:$0xff]
          %v884 = vld [vmem:[#allocation2 + $0xb8] sm:$0xff]
          %v885 = vld [vmem:[#allocation2 + $0xc0] sm:$0xff]
          %v886 = vld [vmem:[#allocation2 + $0xc8] sm:$0xff]
          %v887 = vld [vmem:[#allocation2 + $0xd0] sm:$0xff]
          %v888 = vld [vmem:[#allocation2 + $0xd8] sm:$0xff]
          %v889 = vld [vmem:[#allocation2 + $0xe0] sm:$0xff]
          %v890 = vld [vmem:[#allocation2 + $0xe8] sm:$0xff]
          %v891 = vld [vmem:[#allocation2 + $0xf0] sm:$0xff]
          %v892 = vld [vmem:[#allocation2 + $0xf8] sm:$0xff]
          %v893 = vld [vmem:[%s2] sm:$0x1]
          %v895 = vlaneseq
          %v896 = vshrl.u32 %v895, 7
          %v897 = vsub.s32 0, %v896
          %v898 = vrot.slane %v893, %v897
          %v900 = vadd.f32 %v861, %v898
          %v901 = vadd.f32 %v862, %v898
          %v902 = vadd.f32 %v863, %v898
          %v903 = vadd.f32 %v864, %v898
          %v904 = vadd.f32 %v865, %v898
          %v905 = vadd.f32 %v866, %v898
          %v906 = vadd.f32 %v867, %v898
          %v907 = vadd.f32 %v868, %v898
          %v908 = vadd.f32 %v869, %v898
          %v909 = vadd.f32 %v870, %v898
          %v910 = vadd.f32 %v871, %v898
          %v911 = vadd.f32 %v872, %v898
          %v912 = vadd.f32 %v873, %v898
          %v913 = vadd.f32 %v874, %v898
          %v914 = vadd.f32 %v875, %v898
          %v915 = vadd.f32 %v876, %v898
          %v916 = vadd.f32 %v877, %v898
          %v917 = vadd.f32 %v878, %v898
          %v918 = vadd.f32 %v879, %v898
          %v919 = vadd.f32 %v880, %v898
          %v920 = vadd.f32 %v881, %v898
          %v921 = vadd.f32 %v882, %v898
          %v922 = vadd.f32 %v883, %v898
          %v923 = vadd.f32 %v884, %v898
          %v924 = vadd.f32 %v885, %v898
          %v925 = vadd.f32 %v886, %v898
          %v926 = vadd.f32 %v887, %v898
          %v927 = vadd.f32 %v888, %v898
          %v928 = vadd.f32 %v889, %v898
          %v929 = vadd.f32 %v890, %v898
          %v930 = vadd.f32 %v891, %v898
          %v931 = vadd.f32 %v892, %v898
          %v932 = vmax.f32 %v900, 0.0
          %v933 = vmax.f32 %v901, 0.0
          %v934 = vmax.f32 %v902, 0.0
          %v935 = vmax.f32 %v903, 0.0
          %v936 = vmax.f32 %v904, 0.0
          %v937 = vmax.f32 %v905, 0.0
          %v938 = vmax.f32 %v906, 0.0
          %v939 = vmax.f32 %v907, 0.0
          %v940 = vmax.f32 %v908, 0.0
          %v941 = vmax.f32 %v909, 0.0
          %v942 = vmax.f32 %v910, 0.0
          %v943 = vmax.f32 %v911, 0.0
          %v944 = vmax.f32 %v912, 0.0
          %v945 = vmax.f32 %v913, 0.0
          %v946 = vmax.f32 %v914, 0.0
          %v947 = vmax.f32 %v915, 0.0
          %v948 = vmax.f32 %v916, 0.0
          %v949 = vmax.f32 %v917, 0.0
          %v950 = vmax.f32 %v918, 0.0
          %v951 = vmax.f32 %v919, 0.0
          %v952 = vmax.f32 %v920, 0.0
          %v953 = vmax.f32 %v921, 0.0
          %v954 = vmax.f32 %v922, 0.0
          %v955 = vmax.f32 %v923, 0.0
          %v956 = vmax.f32 %v924, 0.0
          %v957 = vmax.f32 %v925, 0.0
          %v958 = vmax.f32 %v926, 0.0
          %v959 = vmax.f32 %v927, 0.0
          %v960 = vmax.f32 %v928, 0.0
          %v961 = vmax.f32 %v929, 0.0
          %v962 = vmax.f32 %v930, 0.0
          %v963 = vmax.f32 %v931, 0.0
          %v964 = vpack.c.bf16 %v933, %v932
          %v965 = vpack.c.bf16 %v935, %v934
          %v966 = vpack.c.bf16 %v937, %v936
          %v967 = vpack.c.bf16 %v939, %v938
          %v968 = vpack.c.bf16 %v941, %v940
          %v969 = vpack.c.bf16 %v943, %v942
          %v970 = vpack.c.bf16 %v945, %v944
          %v971 = vpack.c.bf16 %v947, %v946
          %v972 = vpack.c.bf16 %v949, %v948
          %v973 = vpack.c.bf16 %v951, %v950
          %v974 = vpack.c.bf16 %v953, %v952
          %v975 = vpack.c.bf16 %v955, %v954
          %v976 = vpack.c.bf16 %v957, %v956
          %v977 = vpack.c.bf16 %v959, %v958
          %v978 = vpack.c.bf16 %v961, %v960
          %v979 = vpack.c.bf16 %v963, %v962
          %v980 = vld [vmem:[%s3] sm:$0xf]
          %v981 = vld [vmem:[%s3 + $0x4] sm:$0xf]
          %v982 = vld [vmem:[%s3 + $0x8] sm:$0xf]
          %v983 = vld [vmem:[%s3 + $0xc] sm:$0xf]
          %v984 = vld [vmem:[%s3 + $0x10] sm:$0xf]
          %v985 = vld [vmem:[%s3 + $0x14] sm:$0xf]
          %v986 = vld [vmem:[%s3 + $0x18] sm:$0xf]
          %v987 = vld [vmem:[%s3 + $0x1c] sm:$0xf]
          %v988 = vld [vmem:[%s3 + $0x20] sm:$0xf]
          %v989 = vld [vmem:[%s3 + $0x24] sm:$0xf]
          %v990 = vld [vmem:[%s3 + $0x28] sm:$0xf]
          %v991 = vld [vmem:[%s3 + $0x2c] sm:$0xf]
          %v992 = vld [vmem:[%s3 + $0x30] sm:$0xf]
          %v993 = vld [vmem:[%s3 + $0x34] sm:$0xf]
          %v994 = vld [vmem:[%s3 + $0x38] sm:$0xf]
          %v995 = vld [vmem:[%s3 + $0x3c] sm:$0xf]
          %v1012 = vunpack.c.l.b16 %v980
          %v1013 = vunpack.c.l.b16 %v981
          %v1014 = vunpack.c.l.b16 %v982
          %v1015 = vunpack.c.l.b16 %v983
          %v1016 = vunpack.c.l.b16 %v984
          %v1017 = vunpack.c.l.b16 %v985
          %v1018 = vunpack.c.l.b16 %v986
          %v1019 = vunpack.c.l.b16 %v987
          %v1020 = vunpack.c.l.b16 %v988
          %v1021 = vunpack.c.l.b16 %v989
          %v1022 = vunpack.c.l.b16 %v990
          %v1023 = vunpack.c.l.b16 %v991
          %v1024 = vunpack.c.l.b16 %v992
          %v1025 = vunpack.c.l.b16 %v993
          %v1026 = vunpack.c.l.b16 %v994
          %v1027 = vunpack.c.l.b16 %v995
          %v1028 = vpack.c.b16 %v1013, %v1012
          %v1029 = vpack.c.b16 %v1015, %v1014
          %v1030 = vpack.c.b16 %v1017, %v1016
          %v1031 = vpack.c.b16 %v1019, %v1018
          %v1032 = vpack.c.b16 %v1021, %v1020
          %v1033 = vpack.c.b16 %v1023, %v1022
          %v1034 = vpack.c.b16 %v1025, %v1024
          %v1035 = vpack.c.b16 %v1027, %v1026
          %1044 = vmatprep.subr.bf16.mxu0 0
          %1045 = vmatpush1.bf16.msra.mxu0 %v1028
          %1046 = vmatprep.subr.bf16.mxu0 0
          %1047 = vmatpush1.bf16.msra.mxu0 %v1029
          %1048 = vmatprep.subr.bf16.mxu0 0
          %1049 = vmatpush1.bf16.msra.mxu0 %v1030
          %1050 = vmatprep.subr.bf16.mxu0 0
          %1051 = vmatpush1.bf16.msra.mxu0 %v1031
          %1052 = vmatprep.subr.bf16.mxu0 0
          %1053 = vmatpush1.bf16.msra.mxu0 %v1032
          %1054 = vmatprep.subr.bf16.mxu0 0
          %1055 = vmatpush1.bf16.msra.mxu0 %v1033
          %1056 = vmatprep.subr.bf16.mxu0 0
          %1057 = vmatpush1.bf16.msra.mxu0 %v1034
          %1058 = vmatprep.subr.bf16.mxu0 0
          %1059 = vmatpush1.bf16.msra.mxu0 %v1035
          %1060 = vmatprep.subr.bf16.mxu0 0
          %1061 = vmatpush1.bf16.msra.mxu0 0
          %1062 = vmatprep.subr.bf16.mxu0 0
          %1063 = vmatpush1.bf16.msra.mxu0 0
          %1064 = vmatprep.subr.bf16.mxu0 0
          %1065 = vmatpush1.bf16.msra.mxu0 0
          %1066 = vmatprep.subr.bf16.mxu0 0
          %1067 = vmatpush1.bf16.msra.mxu0 0
          %1068 = vmatprep.subr.bf16.mxu0 0
          %1069 = vmatpush1.bf16.msra.mxu0 0
          %1070 = vmatprep.subr.bf16.mxu0 0
          %1071 = vmatpush1.bf16.msra.mxu0 0
          %1072 = vmatprep.subr.bf16.mxu0 0
          %1073 = vmatpush1.bf16.msra.mxu0 0
          %1074 = vmatprep.subr.bf16.mxu0 0
          %1075 = vmatpush1.bf16.msra.mxu0 0
          %1076 = vmatprep.mubr.bf16.mxu0 0
          %1077 = vmatmul.mubr.bf16.gmra.mrb[0].mxu0 %v964
          %v1078 = vpop.f32.mrb[0].mxu0
          %v1079 = vadd.f32 0.0, %v1078
          %v1080 = vpop.f32.mrb[0].mxu0
          %v1081 = vpop.f32.mrb[0].mxu0
          %v1082 = vadd.f32 0.0, %v1081
          %v1083 = vpop.f32.mrb[0].mxu0
          %1084 = vmatprep.mubr.bf16.mxu0 0
          %1085 = vmatmul.mubr.bf16.gmra.mrb[0].mxu0 %v965
          %v1086 = vpop.f32.mrb[0].mxu0
          %v1087 = vadd.f32 0.0, %v1086
          %v1088 = vpop.f32.mrb[0].mxu0
          %v1089 = vpop.f32.mrb[0].mxu0
          %v1090 = vadd.f32 0.0, %v1089
          %v1091 = vpop.f32.mrb[0].mxu0
          %1092 = vmatprep.mubr.bf16.mxu0 0
          %1093 = vmatmul.mubr.bf16.gmra.mrb[0].mxu0 %v966
          %v1094 = vpop.f32.mrb[0].mxu0
          %v1095 = vadd.f32 0.0, %v1094
          %v1096 = vpop.f32.mrb[0].mxu0
          %v1097 = vpop.f32.mrb[0].mxu0
          %v1098 = vadd.f32 0.0, %v1097
          %v1099 = vpop.f32.mrb[0].mxu0
          %1100 = vmatprep.mubr.bf16.mxu0 0
          %1101 = vmatmul.mubr.bf16.gmra.mrb[0].mxu0 %v967
          %v1102 = vpop.f32.mrb[0].mxu0
          %v1103 = vadd.f32 0.0, %v1102
          %v1104 = vpop.f32.mrb[0].mxu0
          %v1105 = vpop.f32.mrb[0].mxu0
          %v1106 = vadd.f32 0.0, %v1105
          %v1107 = vpop.f32.mrb[0].mxu0
          %1108 = vmatprep.mubr.bf16.mxu0 0
          %1109 = vmatmul.mubr.bf16.gmra.mrb[0].mxu0 %v968
          %v1110 = vpop.f32.mrb[0].mxu0
          %v1111 = vadd.f32 0.0, %v1110
          %v1112 = vpop.f32.mrb[0].mxu0
          %v1113 = vpop.f32.mrb[0].mxu0
          %v1114 = vadd.f32 0.0, %v1113
          %v1115 = vpop.f32.mrb[0].mxu0
          %1116 = vmatprep.mubr.bf16.mxu0 0
          %1117 = vmatmul.mubr.bf16.gmra.mrb[0].mxu0 %v969
          %v1118 = vpop.f32.mrb[0].mxu0
          %v1119 = vadd.f32 0.0, %v1118
          %v1120 = vpop.f32.mrb[0].mxu0
          %v1121 = vpop.f32.mrb[0].mxu0
          %v1122 = vadd.f32 0.0, %v1121
          %v1123 = vpop.f32.mrb[0].mxu0
          %1124 = vmatprep.mubr.bf16.mxu0 0
          %1125 = vmatmul.mubr.bf16.gmra.mrb[0].mxu0 %v970
          %v1126 = vpop.f32.mrb[0].mxu0
          %v1127 = vadd.f32 0.0, %v1126
          %v1128 = vpop.f32.mrb[0].mxu0
          %v1129 = vpop.f32.mrb[0].mxu0
          %v1130 = vadd.f32 0.0, %v1129
          %v1131 = vpop.f32.mrb[0].mxu0
          %1132 = vmatprep.mubr.bf16.mxu0 0
          %1133 = vmatmul.mubr.bf16.gmra.mrb[0].mxu0 %v971
          %v1134 = vpop.f32.mrb[0].mxu0
          %v1135 = vadd.f32 0.0, %v1134
          %v1136 = vpop.f32.mrb[0].mxu0
          %v1137 = vpop.f32.mrb[0].mxu0
          %v1138 = vadd.f32 0.0, %v1137
          %v1139 = vpop.f32.mrb[0].mxu0
          %1140 = vmatprep.mubr.bf16.mxu0 0
          %1141 = vmatmul.mubr.bf16.gmra.mrb[0].mxu0 %v972
          %v1142 = vpop.f32.mrb[0].mxu0
          %v1143 = vadd.f32 0.0, %v1142
          %v1144 = vpop.f32.mrb[0].mxu0
          %v1145 = vpop.f32.mrb[0].mxu0
          %v1146 = vadd.f32 0.0, %v1145
          %v1147 = vpop.f32.mrb[0].mxu0
          %1148 = vmatprep.mubr.bf16.mxu0 0
          %1149 = vmatmul.mubr.bf16.gmra.mrb[0].mxu0 %v973
          %v1150 = vpop.f32.mrb[0].mxu0
          %v1151 = vadd.f32 0.0, %v1150
          %v1152 = vpop.f32.mrb[0].mxu0
          %v1153 = vpop.f32.mrb[0].mxu0
          %v1154 = vadd.f32 0.0, %v1153
          %v1155 = vpop.f32.mrb[0].mxu0
          %1156 = vmatprep.mubr.bf16.mxu0 0
          %1157 = vmatmul.mubr.bf16.gmra.mrb[0].mxu0 %v974
          %v1158 = vpop.f32.mrb[0].mxu0
          %v1159 = vadd.f32 0.0, %v1158
          %v1160 = vpop.f32.mrb[0].mxu0
          %v1161 = vpop.f32.mrb[0].mxu0
          %v1162 = vadd.f32 0.0, %v1161
          %v1163 = vpop.f32.mrb[0].mxu0
          %1164 = vmatprep.mubr.bf16.mxu0 0
          %1165 = vmatmul.mubr.bf16.gmra.mrb[0].mxu0 %v975
          %v1166 = vpop.f32.mrb[0].mxu0
          %v1167 = vadd.f32 0.0, %v1166
          %v1168 = vpop.f32.mrb[0].mxu0
          %v1169 = vpop.f32.mrb[0].mxu0
          %v1170 = vadd.f32 0.0, %v1169
          %v1171 = vpop.f32.mrb[0].mxu0
          %1172 = vmatprep.mubr.bf16.mxu0 0
          %1173 = vmatmul.mubr.bf16.gmra.mrb[0].mxu0 %v976
          %v1174 = vpop.f32.mrb[0].mxu0
          %v1175 = vadd.f32 0.0, %v1174
          %v1176 = vpop.f32.mrb[0].mxu0
          %v1177 = vpop.f32.mrb[0].mxu0
          %v1178 = vadd.f32 0.0, %v1177
          %v1179 = vpop.f32.mrb[0].mxu0
          %1180 = vmatprep.mubr.bf16.mxu0 0
          %1181 = vmatmul.mubr.bf16.gmra.mrb[0].mxu0 %v977
          %v1182 = vpop.f32.mrb[0].mxu0
          %v1183 = vadd.f32 0.0, %v1182
          %v1184 = vpop.f32.mrb[0].mxu0
          %v1185 = vpop.f32.mrb[0].mxu0
          %v1186 = vadd.f32 0.0, %v1185
          %v1187 = vpop.f32.mrb[0].mxu0
          %1188 = vmatprep.mubr.bf16.mxu0 0
          %1189 = vmatmul.mubr.bf16.gmra.mrb[0].mxu0 %v978
          %v1190 = vpop.f32.mrb[0].mxu0
          %v1191 = vadd.f32 0.0, %v1190
          %v1192 = vpop.f32.mrb[0].mxu0
          %v1193 = vpop.f32.mrb[0].mxu0
          %v1194 = vadd.f32 0.0, %v1193
          %v1195 = vpop.f32.mrb[0].mxu0
          %1196 = vmatprep.mubr.bf16.mxu0 0
          %1197 = vmatmul.mubr.bf16.gmra.mrb[0].mxu0 %v979
          %v1198 = vpop.f32.mrb[0].mxu0
          %v1199 = vadd.f32 0.0, %v1198
          %v1200 = vpop.f32.mrb[0].mxu0
          %v1201 = vpop.f32.mrb[0].mxu0
          %v1202 = vadd.f32 0.0, %v1201
          %v1203 = vpop.f32.mrb[0].mxu0
          %1204 = vdwg.mxu0
          %v1205 = vpack.c.bf16 %v1082, %v1079
          %v1206 = vpack.c.bf16 %v1090, %v1087
          %v1207 = vpack.c.bf16 %v1098, %v1095
          %v1208 = vpack.c.bf16 %v1106, %v1103
          %v1209 = vpack.c.bf16 %v1114, %v1111
          %v1210 = vpack.c.bf16 %v1122, %v1119
          %v1211 = vpack.c.bf16 %v1130, %v1127
          %v1212 = vpack.c.bf16 %v1138, %v1135
          %v1213 = vpack.c.bf16 %v1146, %v1143
          %v1214 = vpack.c.bf16 %v1154, %v1151
          %v1215 = vpack.c.bf16 %v1162, %v1159
          %v1216 = vpack.c.bf16 %v1170, %v1167
          %v1217 = vpack.c.bf16 %v1178, %v1175
          %v1218 = vpack.c.bf16 %v1186, %v1183
          %v1219 = vpack.c.bf16 %v1194, %v1191
          %v1220 = vpack.c.bf16 %v1202, %v1199
          %v1237 = vunpack.c.l.b16 %v1205
          %v1238 = vunpack.c.h.b16 %v1205
          %v1239 = vunpack.c.l.b16 %v1206
          %v1240 = vunpack.c.h.b16 %v1206
          %v1241 = vunpack.c.l.b16 %v1207
          %v1242 = vunpack.c.h.b16 %v1207
          %v1243 = vunpack.c.l.b16 %v1208
          %v1244 = vunpack.c.h.b16 %v1208
          %v1245 = vunpack.c.l.b16 %v1209
          %v1246 = vunpack.c.h.b16 %v1209
          %v1247 = vunpack.c.l.b16 %v1210
          %v1248 = vunpack.c.h.b16 %v1210
          %v1249 = vunpack.c.l.b16 %v1211
          %v1250 = vunpack.c.h.b16 %v1211
          %v1251 = vunpack.c.l.b16 %v1212
          %v1252 = vunpack.c.h.b16 %v1212
          %v1253 = vunpack.c.l.b16 %v1213
          %v1254 = vunpack.c.h.b16 %v1213
          %v1255 = vunpack.c.l.b16 %v1214
          %v1256 = vunpack.c.h.b16 %v1214
          %v1257 = vunpack.c.l.b16 %v1215
          %v1258 = vunpack.c.h.b16 %v1215
          %v1259 = vunpack.c.l.b16 %v1216
          %v1260 = vunpack.c.h.b16 %v1216
          %v1261 = vunpack.c.l.b16 %v1217
          %v1262 = vunpack.c.h.b16 %v1217
          %v1263 = vunpack.c.l.b16 %v1218
          %v1264 = vunpack.c.h.b16 %v1218
          %v1265 = vunpack.c.l.b16 %v1219
          %v1266 = vunpack.c.h.b16 %v1219
          %v1267 = vunpack.c.l.b16 %v1220
          %v1268 = vunpack.c.h.b16 %v1220
          %v1269 = vpack.c.b16 %v1237, %v1237
          %v1270 = vpack.c.b16 %v1238, %v1238
          %v1271 = vpack.c.b16 %v1239, %v1239
          %v1272 = vpack.c.b16 %v1240, %v1240
          %v1273 = vpack.c.b16 %v1241, %v1241
          %v1274 = vpack.c.b16 %v1242, %v1242
          %v1275 = vpack.c.b16 %v1243, %v1243
          %v1276 = vpack.c.b16 %v1244, %v1244
          %v1277 = vpack.c.b16 %v1245, %v1245
          %v1278 = vpack.c.b16 %v1246, %v1246
          %v1279 = vpack.c.b16 %v1247, %v1247
          %v1280 = vpack.c.b16 %v1248, %v1248
          %v1281 = vpack.c.b16 %v1249, %v1249
          %v1282 = vpack.c.b16 %v1250, %v1250
          %v1283 = vpack.c.b16 %v1251, %v1251
          %v1284 = vpack.c.b16 %v1252, %v1252
          %v1285 = vpack.c.b16 %v1253, %v1253
          %v1286 = vpack.c.b16 %v1254, %v1254
          %v1287 = vpack.c.b16 %v1255, %v1255
          %v1288 = vpack.c.b16 %v1256, %v1256
          %v1289 = vpack.c.b16 %v1257, %v1257
          %v1290 = vpack.c.b16 %v1258, %v1258
          %v1291 = vpack.c.b16 %v1259, %v1259
          %v1292 = vpack.c.b16 %v1260, %v1260
          %v1293 = vpack.c.b16 %v1261, %v1261
          %v1294 = vpack.c.b16 %v1262, %v1262
          %v1295 = vpack.c.b16 %v1263, %v1263
          %v1296 = vpack.c.b16 %v1264, %v1264
          %v1297 = vpack.c.b16 %v1265, %v1265
          %v1298 = vpack.c.b16 %v1266, %v1266
          %v1299 = vpack.c.b16 %v1267, %v1267
          %v1300 = vpack.c.b16 %v1268, %v1268
          %1333 = vst [vmem:[%s236] sm:$0xf] %v1269
          %1334 = vst [vmem:[%s236 + $0x4] sm:$0xf] %v1270
          %1335 = vst [vmem:[%s236 + $0x8] sm:$0xf] %v1271
          %1336 = vst [vmem:[%s236 + $0xc] sm:$0xf] %v1272
          %1337 = vst [vmem:[%s236 + $0x10] sm:$0xf] %v1273
          %1338 = vst [vmem:[%s236 + $0x14] sm:$0xf] %v1274
          %1339 = vst [vmem:[%s236 + $0x18] sm:$0xf] %v1275
          %1340 = vst [vmem:[%s236 + $0x1c] sm:$0xf] %v1276
          %1341 = vst [vmem:[%s236 + $0x20] sm:$0xf] %v1277
          %1342 = vst [vmem:[%s236 + $0x24] sm:$0xf] %v1278
          %1343 = vst [vmem:[%s236 + $0x28] sm:$0xf] %v1279
          %1344 = vst [vmem:[%s236 + $0x2c] sm:$0xf] %v1280
          %1345 = vst [vmem:[%s236 + $0x30] sm:$0xf] %v1281
          %1346 = vst [vmem:[%s236 + $0x34] sm:$0xf] %v1282
          %1347 = vst [vmem:[%s236 + $0x38] sm:$0xf] %v1283
          %1348 = vst [vmem:[%s236 + $0x3c] sm:$0xf] %v1284
          %1349 = vst [vmem:[%s236 + $0x40] sm:$0xf] %v1285
          %1350 = vst [vmem:[%s236 + $0x44] sm:$0xf] %v1286
          %1351 = vst [vmem:[%s236 + $0x48] sm:$0xf] %v1287
          %1352 = vst [vmem:[%s236 + $0x4c] sm:$0xf] %v1288
          %1353 = vst [vmem:[%s236 + $0x50] sm:$0xf] %v1289
          %1354 = vst [vmem:[%s236 + $0x54] sm:$0xf] %v1290
          %1355 = vst [vmem:[%s236 + $0x58] sm:$0xf] %v1291
          %1356 = vst [vmem:[%s236 + $0x5c] sm:$0xf] %v1292
          %1357 = vst [vmem:[%s236 + $0x60] sm:$0xf] %v1293
          %1358 = vst [vmem:[%s236 + $0x64] sm:$0xf] %v1294
          %1359 = vst [vmem:[%s236 + $0x68] sm:$0xf] %v1295
          %1360 = vst [vmem:[%s236 + $0x6c] sm:$0xf] %v1296
          %1361 = vst [vmem:[%s236 + $0x70] sm:$0xf] %v1297
          %1362 = vst [vmem:[%s236 + $0x74] sm:$0xf] %v1298
          %1363 = vst [vmem:[%s236 + $0x78] sm:$0xf] %v1299
          %1364 = vst [vmem:[%s236 + $0x7c] sm:$0xf] %v1300
        $region48: #{gcn_forward.2} parent=35 // pred_fallthru
          _
        %s1365 = smul.u32 32, %s22
        %p1366 = scmp.lt.s32.totalorder %s1365, 95
        %s1367 = scalar_select %p1366, %s1365, 95
        %s1368 = smul.addr %s1367, 4
        %s1369 = scalar_lea.vmem %s4, %s1368
        // Predicated region
        $region49: #{gcn_forward.2} parent=35 // pred_check
          %p1370 = pneg %p139
        $region50: #{gcn_forward.2} parent=35 // pred_check_branch
          %1372 = sbr.rel (%p1370) target = $region52
        $region51: #{gcn_forward.2} parent=35 // pred_region
          %s1373 = smul.u32 32, %s22
        $region52: #{gcn_forward.2} parent=35 // pred_fallthru
          _
      $region36: #{gcn_forward.2} parent=5 // pred_fallthru
        _
      %p1374 = scmp.le.s32.totalorder 2, %s13
      // Predicated region
      $region53: #{gcn_forward.2} parent=5 // pred_check
        %p1375 = pneg %p1374
      $region54: #{gcn_forward.2} parent=5 // pred_check_branch
        %1377 = sbr.rel (%p1375) target = $region56
      $region55: #{gcn_forward.2} parent=5 // pred_region
        %s1378 = ssub.s32 %s13, 2
        // Predicated region
        $region57: #{gcn_forward.2} parent=55 // pred_check
          %p1379 = pneg %p145
        $region58: #{gcn_forward.2} parent=55 // pred_check_branch
          %1381 = sbr.rel (%p1379) target = $region60
        $region59: #{gcn_forward.2} parent=55 // pred_region
          %s1382 = smul.u32 32, %s24
          %p1383 = scmp.lt.s32.totalorder %s1382, 95
          %s1384 = scalar_select %p1383, %s1382, 95
          %s1385 = smul.addr %s1384, 4
          %s1386 = scalar_lea.vmem %s4, %s1385
        $region60: #{gcn_forward.2} parent=55 // pred_fallthru
          _
      $region56: #{gcn_forward.2} parent=5 // pred_fallthru
        _
    $region6: #{gcn_forward.2} parent=1 // loop_footer
      %s17 = sadd.s32 1, %s13
    $region7: #{gcn_forward.2} parent=1 // loop_footer_branch
      %12 = sbr.rel target = $region3
    $region8: #{gcn_forward.2} parent=1 // loop_exit
      _
    %1387 = vsyncpa [#allocation4], 1
    %s1388 = scalar_lea.sflag [#allocation4], 1
    %1389 = vsyncpa %s1388, 1

</llo_original>
